<compile_context>
chip_gen: v6e
topology: v6e:2x2x1
jax: 0.10.0
libtpu: 0.0.40
codegen_flags: <defaults>
</compile_context>

<pallas_src>
import math
from functools import partial

import jax
import jax.numpy as jnp
from jax import lax
from jax.experimental import pallas as pl
from jax.experimental.pallas import tpu as pltpu


def _round_up(x, m):
    return (x + m - 1) // m * m


# --------------------------------------------------------------------------- #
# Fused bidirectional GRU kernel: per grid step (one time block)
#   1) gi_block = x_cat_block @ W_i_cat + b_i_cat   (hoisted, off the serial path)
#   2) serial recurrence over the block: one block-diagonal hidden matmul +
#      combined gate math per step for BOTH directions.
# Hidden state (both directions, (Bp, 2Hp)) carried across grid steps in VMEM.
# Gate column layout: [r_f, r_b, z_f, z_b, n_f, n_b], each slab Hp wide.
# --------------------------------------------------------------------------- #
def _bigru_rec_kernel(x_ref, wi_ref, whh_ref, bi_ref, bhh_ref,
                      outf_ref, outb_ref, hlast_ref,
                      gi_sc, hc_sc, *,
                      seq_len, block_t, hidden_pad, batch_pad, mask_time, unroll):
    g = pl.program_id(0)
    n_blocks = pl.num_programs(0)
    Tc = block_t
    Hp = hidden_pad
    Bp = batch_pad
    H2 = 2 * Hp
    H6 = 6 * Hp

    @pl.when(g == 0)
    def _():
        hc_sc[...] = jnp.zeros_like(hc_sc)

    # ---- 1) fused input projection for this time block (both directions) ----
    gi_sc[...] = (jnp.dot(x_ref[...], wi_ref[...],
                          preferred_element_type=jnp.float32)
                  + bi_ref[...])

    whh = whh_ref[...]                                    # (2Hp, 6Hp), MXU dtype
    # hoist bias broadcast out of the time loop (JAX does not CSE broadcasts)
    bhh = jnp.broadcast_to(bhh_ref[...], (Bp, H6))

    def gru_step(gi, h_prev):
        gh = jnp.dot(h_prev.astype(whh.dtype), whh,
                     preferred_element_type=jnp.float32) + bhh
        # combined gates for both directions; all slices lane-aligned (Hp%128==0)
        r = jax.nn.sigmoid(gi[:, 0:H2] + gh[:, 0:H2])
        z = jax.nn.sigmoid(gi[:, H2:2 * H2] + gh[:, H2:2 * H2])
        n = jnp.tanh(gi[:, 2 * H2:3 * H2] + r * gh[:, 2 * H2:3 * H2])
        return (1.0 - z) * n + z * h_prev

    def run_block(masked):
        if masked:
            is_fwd_half = lax.broadcasted_iota(jnp.int32, (Bp, H2), 1) < Hp
            t0 = g * Tc
            tp = n_blocks * Tc

        def step(t, h):
            row = pl.multiple_of(t * Bp, 8)
            gi = gi_sc[pl.ds(row, Bp), :]                 # (Bp, 6Hp)
            h_new = gru_step(gi, h)
            if masked:   # only traced for boundary blocks of padded sequences
                keep_f = (t0 + t) < seq_len               # fwd: pad at block end
                keep_b = (tp - 1 - (t0 + t)) < seq_len    # bwd: pad at block start
                keep = jnp.where(is_fwd_half, keep_f, keep_b)
                h_new = jnp.where(keep, h_new, h)
            outf_ref[t] = h_new[:, 0:Hp]                  # fwd, local time t
            outb_ref[Tc - 1 - t] = h_new[:, Hp:H2]        # bwd, reversed local time
            return h_new

        hc_sc[...] = lax.fori_loop(0, Tc, step, hc_sc[...], unroll=unroll)

    if mask_time:
        # padded time steps only touch the first (bwd) and last (fwd) blocks
        boundary = jnp.logical_or(g == 0, g == n_blocks - 1)

        @pl.when(boundary)
        def _():
            run_block(True)

        @pl.when(jnp.logical_not(boundary))
        def _():
            run_block(False)
    else:
        run_block(False)

    @pl.when(g == n_blocks - 1)
    def _():
        hlast_ref[...] = hc_sc[...]


# --------------------------------------------------------------------------- #
# Parameter packing: interleaved gate columns [r_f, r_b, z_f, z_b, n_f, n_b],
# each gate slab padded to Hp.  Padded rows/cols are zero so padded hidden
# lanes remain exactly 0 through the recurrence.
# --------------------------------------------------------------------------- #
def _pack_input_weights(w_f, w_b, H, Hp, E):
    # w_*: (3H, E) PyTorch layout, gate order [r, z, n]  ->  (2E, 6Hp)
    W = jnp.zeros((2 * E, 6 * Hp), jnp.float32)
    for k in range(3):
        W = W.at[0:E, (2 * k) * Hp:(2 * k) * Hp + H].set(w_f[k * H:(k + 1) * H, :].T)
        W = W.at[E:2 * E, (2 * k + 1) * Hp:(2 * k + 1) * Hp + H].set(
            w_b[k * H:(k + 1) * H, :].T)
    return W


def _pack_hidden_weights(w_f, w_b, H, Hp):
    # w_*: (3H, H)  ->  block-diagonal (2Hp, 6Hp): rows 0:Hp feed fwd gate cols,
    # rows Hp:2Hp feed bwd gate cols.
    W = jnp.zeros((2 * Hp, 6 * Hp), jnp.float32)
    for k in range(3):
        W = W.at[0:H, (2 * k) * Hp:(2 * k) * Hp + H].set(w_f[k * H:(k + 1) * H, :].T)
        W = W.at[Hp:Hp + H, (2 * k + 1) * Hp:(2 * k + 1) * Hp + H].set(
            w_b[k * H:(k + 1) * H, :].T)
    return W


def _pack_bias(b_f, b_b, H, Hp):
    b = jnp.zeros((1, 6 * Hp), jnp.float32)
    for k in range(3):
        b = b.at[0, (2 * k) * Hp:(2 * k) * Hp + H].set(b_f[k * H:(k + 1) * H])
        b = b.at[0, (2 * k + 1) * Hp:(2 * k + 1) * Hp + H].set(b_b[k * H:(k + 1) * H])
    return b


# --------------------------------------------------------------------------- #
# Wrapper around the single fused pallas_call.
# --------------------------------------------------------------------------- #
def bigru_pallas(emb_tm, params, hidden_dim, *, time_block=128,
                 mxu_dtype=jnp.bfloat16):
    """emb_tm: (T, B, E) float32 (time-major).
    Returns (out_f, out_b, h_last) with padded shapes (Tp,Bp,Hp),(Tp,Bp,Hp),(Bp,2Hp)."""
    T, B, E = emb_tm.shape
    H = hidden_dim
    Hp = _round_up(H, 128)              # lane-aligned hidden size
    Bp = _round_up(B, 8)                # sublane-aligned batch
    Tc = min(time_block, T)             # time block (grid step)
    Tp = _round_up(T, Tc)
    nG = Tp // Tc
    mask_time = (Tp != T)
    row_blk = Tc * Bp

    # ---- pack / pad parameters (zero padding keeps padded lanes inert) ----
    wi = _pack_input_weights(params["w_ih_f"], params["w_ih_b"], H, Hp, E).astype(mxu_dtype)
    whh = _pack_hidden_weights(params["w_hh_f"], params["w_hh_b"], H, Hp).astype(mxu_dtype)
    bi = _pack_bias(params["b_ih_f"], params["b_ih_b"], H, Hp)     # fp32 (folded into gi)
    bhh = _pack_bias(params["b_hh_f"], params["b_hh_b"], H, Hp)    # fp32

    # ---- activations: pad time/batch; bwd stream is time-reversed up front ----
    x = jnp.pad(emb_tm.astype(jnp.float32), ((0, Tp - T), (0, Bp - B), (0, 0)))
    x_cat = jnp.concatenate([x, x[::-1]], axis=-1)                 # (Tp, Bp, 2E)
    x_cat = x_cat.reshape(Tp * Bp, 2 * E).astype(mxu_dtype)

    itemsize = jnp.dtype(mxu_dtype).itemsize
    cost = pl.CostEstimate(
        flops=int(2 * Tp * Bp * (2 * Hp) * (6 * Hp)          # block-diag hidden matmul
                  + 2 * Tp * Bp * (2 * E) * (6 * Hp)),        # fused input projection
        transcendentals=int(Tp * Bp * 6 * Hp),
        bytes_accessed=int(Tp * Bp * 2 * E * itemsize         # x_cat (read)
                           + 2 * Tp * Bp * Hp * 4             # out_f / out_b (write)
                           + Bp * 2 * Hp * 4                  # h_last
                           + (2 * E + 2 * Hp) * 6 * Hp * itemsize
                           + 2 * 6 * Hp * 4),
    )

    # explicit scoped-VMEM budget: streamed blocks (double-buffered) + weights + scratch
    vmem_need = (2 * row_blk * 2 * E * itemsize
                 + 2 * 2 * Tc * Bp * Hp * 4
                 + 2 * Bp * 2 * Hp * 4
                 + 2 * ((2 * E + 2 * Hp) * 6 * Hp * itemsize + 2 * 6 * Hp * 4)
                 + row_blk * 6 * Hp * 4 + Bp * 2 * Hp * 4)
    vmem_limit = int(min(64 << 20, max(2 * vmem_need, 32 << 20)))

    kernel = partial(_bigru_rec_kernel, seq_len=T, block_t=Tc, hidden_pad=Hp,
                     batch_pad=Bp, mask_time=mask_time, unroll=4)

    out_f, out_b, h_last = pl.pallas_call(
        kernel,
        out_shape=(jax.ShapeDtypeStruct((Tp, Bp, Hp), jnp.float32),
                   jax.ShapeDtypeStruct((Tp, Bp, Hp), jnp.float32),
                   jax.ShapeDtypeStruct((Bp, 2 * Hp), jnp.float32)),
        grid_spec=pltpu.PrefetchScalarGridSpec(
            num_scalar_prefetch=0,
            grid=(nG,),
            in_specs=[
                pl.BlockSpec((row_blk, 2 * E), lambda g: (g, 0)),       # x_cat block
                pl.BlockSpec((2 * E, 6 * Hp), lambda g: (0, 0)),        # W_i_cat
                pl.BlockSpec((2 * Hp, 6 * Hp), lambda g: (0, 0)),       # W_hh block-diag
                pl.BlockSpec((1, 6 * Hp), lambda g: (0, 0)),            # b_i_cat
                pl.BlockSpec((1, 6 * Hp), lambda g: (0, 0)),            # b_hh_cat
            ],
            out_specs=(
                pl.BlockSpec((Tc, Bp, Hp), lambda g: (g, 0, 0)),        # fwd outputs
                pl.BlockSpec((Tc, Bp, Hp), lambda g: (nG - 1 - g, 0, 0)),  # bwd outputs
                pl.BlockSpec((Bp, 2 * Hp), lambda g: (0, 0)),           # final hidden
            ),
            scratch_shapes=[pltpu.VMEM((row_blk, 6 * Hp), jnp.float32),  # gi block
                            pltpu.VMEM((Bp, 2 * Hp), jnp.float32)],      # h carry
        ),
        compiler_params=pltpu.CompilerParams(
            dimension_semantics=("arbitrary",),
            vmem_limit_bytes=vmem_limit),
        cost_estimate=cost,
    )(x_cat, wi, whh, bi, bhh)

    return out_f, out_b, h_last


# --------------------------- Encoder (wrapper) ------------------------------ #
def init_encoder_params(key, input_dim, embedding_dim, hidden_dim):
    k = 1.0 / math.sqrt(hidden_dim)
    ks = jax.random.split(key, 9)
    u = lambda kk, shape: jax.random.uniform(kk, shape, jnp.float32, -k, k)
    return {
        "embedding": jax.random.normal(ks[0], (input_dim, embedding_dim), jnp.float32),
        "w_ih_f": u(ks[1], (3 * hidden_dim, embedding_dim)),
        "w_hh_f": u(ks[2], (3 * hidden_dim, hidden_dim)),
        "b_ih_f": u(ks[3], (3 * hidden_dim,)),
        "b_hh_f": u(ks[4], (3 * hidden_dim,)),
        "w_ih_b": u(ks[5], (3 * hidden_dim, embedding_dim)),
        "w_hh_b": u(ks[6], (3 * hidden_dim, hidden_dim)),
        "b_ih_b": u(ks[7], (3 * hidden_dim,)),
        "b_hh_b": u(ks[8], (3 * hidden_dim,)),
    }


@partial(jax.jit,
         static_argnames=("hidden_dim", "cat_or_add", "time_block", "mxu_dtype"))
def encoder_forward(params, token_seq, hidden_dim, cat_or_add="cat",
                    time_block=128, mxu_dtype=jnp.bfloat16):
    """token_seq: (B, T) int32.  Mirrors Encoder.forward (batch_first).
    NOTE: bf16 weights keep an fp32 hidden carry; validate drift at production T."""
    embedded = jnp.take(params["embedding"], token_seq, axis=0)        # (B, T, E)
    emb_tm = jnp.transpose(embedded, (1, 0, 2)).astype(jnp.float32)    # (T, B, E)

    out_f, out_b, h_last = bigru_pallas(
        emb_tm, params, hidden_dim, time_block=time_block, mxu_dtype=mxu_dtype)

    B, T = token_seq.shape
    H = hidden_dim
    Hp = _round_up(H, 128)
    of = out_f[:T, :B, :H]
    ob = out_b[:T, :B, :H]
    hf = h_last[:B, 0:H]
    hb = h_last[:B, Hp:Hp + H]

    if cat_or_add == "add":
        outputs = jnp.transpose(of + ob, (1, 0, 2))                    # (B, T, H)
        last_hidden = hf + hb                                          # (B, H)
    else:
        outputs = jnp.transpose(
            jnp.concatenate([of, ob], axis=-1), (1, 0, 2))             # (B, T, 2H)
        last_hidden = jnp.concatenate([hf, hb], axis=1)                # (B, 2H)
    return outputs, last_hidden


# ------------------------- pure-JAX reference ------------------------------- #
def _ref_forward(params, token_seq, hidden_dim, cat_or_add="cat"):
    H = hidden_dim
    emb = jnp.take(params["embedding"], token_seq, axis=0)             # (B, T, E)
    B = emb.shape[0]
    xs = jnp.transpose(emb, (1, 0, 2))                                 # (T, B, E)

    def run_dir(xs_dir, w_ih, w_hh, b_ih, b_hh):
        def step(h, x):
            gi = x @ w_ih.T + b_ih
            gh = h @ w_hh.T + b_hh
            r = jax.nn.sigmoid(gi[:, 0:H] + gh[:, 0:H])
            z = jax.nn.sigmoid(gi[:, H:2 * H] + gh[:, H:2 * H])
            n = jnp.tanh(gi[:, 2 * H:3 * H] + r * gh[:, 2 * H:3 * H])
            h = (1.0 - z) * n + z * h
            return h, h
        h0 = jnp.zeros((B, H), jnp.float32)
        h_last, ys = lax.scan(step, h0, xs_dir)
        return ys, h_last

    yf, hf = run_dir(xs, params["w_ih_f"], params["w_hh_f"],
                     params["b_ih_f"], params["b_hh_f"])
    yb_rev, hb = run_dir(xs[::-1], params["w_ih_b"], params["w_hh_b"],
                         params["b_ih_b"], params["b_hh_b"])
    yb = yb_rev[::-1]

    if cat_or_add == "add":
        outputs = jnp.transpose(yf + yb, (1, 0, 2))
        last_hidden = hf + hb
    else:
        outputs = jnp.transpose(jnp.concatenate([yf, yb], axis=-1), (1, 0, 2))
        last_hidden = jnp.concatenate([hf, hb], axis=1)
    return outputs, last_hidden


# --------------------------------- main -------------------------------------- #
if __name__ == "__main__":
    input_dim = 16       # vocab size
    embedding_dim = 8
    hidden_dim = 16

    key = jax.random.PRNGKey(0)
    pkey, tkey = jax.random.split(key)
    params = init_encoder_params(pkey, input_dim, embedding_dim, hidden_dim)

    configs = [
        # (batch, seq, time_block, mode,  mxu_dtype,    tol)
        (2, 8, 4, "cat", jnp.float32, 1e-4),    # multi-block grid, reversed bwd stream
        (2, 8, 4, "add", jnp.float32, 1e-4),    # 'add' merge branch
        (3, 7, 4, "cat", jnp.float32, 1e-4),    # batch/time padding + boundary-mask path
        (2, 8, 8, "cat", jnp.bfloat16, 2.5e-2), # bf16 MXU weights/inputs (v6e/v7x path)
        (3, 19, 8, "add", jnp.bfloat16, 5e-2),  # bf16 + padding + multi-block
        (2, 64, 16, "cat", jnp.float32, 1e-4),  # longer sequence, 4 time blocks
    ]
    for i, (batch, seq, tb, mode, mdt, tol) in enumerate(configs):
        tk = jax.random.fold_in(tkey, i)
        token_seq = jax.random.randint(tk, (batch, seq), 0, input_dim,
                                       dtype=jnp.int32)
        out, hid = encoder_forward(params, token_seq, hidden_dim, mode,
                                   time_block=tb, mxu_dtype=mdt)
        jax.block_until_ready((out, hid))

        ref_out, ref_hid = _ref_forward(params, token_seq, hidden_dim, mode)
        exp_h = hidden_dim if mode == "add" else 2 * hidden_dim
        assert out.shape == (batch, seq, exp_h), f"bad output shape, cfg {i}"
        assert hid.shape == (batch, exp_h), f"bad hidden shape, cfg {i}"
        assert jnp.allclose(out, ref_out, atol=tol, rtol=tol), f"outputs mismatch cfg {i}"
        assert jnp.allclose(hid, ref_hid, atol=tol, rtol=tol), f"hidden mismatch cfg {i}"

    print("KERNEL_OK")
</pallas_src>

<mosaic_0001>
module attributes {stable_mosaic.version = 11 : i64} {
  func.func @_bigru_rec_kernel(%arg0: i32, %arg1: memref<32x16xf32, #tpu.memory_space<vmem>>, %arg2: memref<16x768xf32, #tpu.memory_space<vmem>>, %arg3: memref<256x768xf32, #tpu.memory_space<vmem>>, %arg4: memref<1x768xf32, #tpu.memory_space<vmem>>, %arg5: memref<1x768xf32, #tpu.memory_space<vmem>>, %arg6: memref<4x8x128xf32, #tpu.memory_space<vmem>>, %arg7: memref<4x8x128xf32, #tpu.memory_space<vmem>>, %arg8: memref<8x256xf32, #tpu.memory_space<vmem>>, %arg9: memref<32x768xf32, #tpu.memory_space<vmem>>, %arg10: memref<8x256xf32, #tpu.memory_space<vmem>>) attributes {dimension_semantics = [#tpu.dimension_semantics<arbitrary>], iteration_bounds = array<i64: 2>, scalar_prefetch = 0 : i64, scratch_operands = 2 : i64, tpu.core_type = #tpu.core_type<tc>, window_params = [{transform_indices = @transform_0, window_bounds = array<i64: 32, 16>}, {pipeline_mode = #tpu.pipeline_mode<synchronous>, transform_indices = @transform_1, window_bounds = array<i64: 16, 768>}, {pipeline_mode = #tpu.pipeline_mode<synchronous>, transform_indices = @transform_2, window_bounds = array<i64: 256, 768>}, {pipeline_mode = #tpu.pipeline_mode<synchronous>, transform_indices = @transform_3, window_bounds = array<i64: 1, 768>}, {pipeline_mode = #tpu.pipeline_mode<synchronous>, transform_indices = @transform_4, window_bounds = array<i64: 1, 768>}, {transform_indices = @transform_5, window_bounds = array<i64: 4, 8, 128>}, {transform_indices = @transform_6, window_bounds = array<i64: 4, 8, 128>}, {pipeline_mode = #tpu.pipeline_mode<synchronous>, transform_indices = @transform_7, window_bounds = array<i64: 8, 256>}]} {
    %c0_i32 = arith.constant 0 : i32
    %0 = arith.cmpi eq, %arg0, %c0_i32 : i32
    %1 = arith.extui %0 : i1 to i32
    %c0_i32_0 = arith.constant 0 : i32
    %2 = arith.cmpi ne, %1, %c0_i32_0 : i32
    scf.if %2 {
      %cst_62 = arith.constant 0.000000e+00 : f32
      %191 = vector.broadcast %cst_62 : f32 to vector<8x256xf32>
      %c0_63 = arith.constant 0 : index
      %c0_64 = arith.constant 0 : index
      %192 = vector.load %arg10[%c0_63, %c0_64] : memref<8x256xf32, #tpu.memory_space<vmem>>, vector<8x256xf32>
      tpu.vector_store %arg10[%c0_63, %c0_64], %191 {strides = array<i32>} : memref<8x256xf32, #tpu.memory_space<vmem>>, vector<8x256xf32>,
    } else {
    }
    %c0 = arith.constant 0 : index
    %c0_1 = arith.constant 0 : index
    %3 = vector.load %arg1[%c0, %c0_1] : memref<32x16xf32, #tpu.memory_space<vmem>>, vector<32x16xf32>
    %c0_2 = arith.constant 0 : index
    %c0_3 = arith.constant 0 : index
    %4 = vector.load %arg2[%c0_2, %c0_3] : memref<16x768xf32, #tpu.memory_space<vmem>>, vector<16x768xf32>
    %cst = arith.constant dense<0.000000e+00> : vector<32x768xf32>
    %5 = tpu.matmul %3, %4, %cst {dimension_numbers = #tpu.dot_dimension_numbers<[1], [0], [0], [1], [0, 0, 1, 1], [], []>} : vector<32x16xf32>, vector<16x768xf32>, vector<32x768xf32> -> vector<32x768xf32>
    %c0_4 = arith.constant 0 : index
    %c0_5 = arith.constant 0 : index
    %6 = vector.load %arg4[%c0_4, %c0_5] : memref<1x768xf32, #tpu.memory_space<vmem>>, vector<1x768xf32>
    %7 = vector.broadcast %6 : vector<1x768xf32> to vector<32x768xf32>
    %8 = arith.addf %5, %7 : vector<32x768xf32>
    %c0_6 = arith.constant 0 : index
    %c0_7 = arith.constant 0 : index
    %9 = vector.load %arg9[%c0_6, %c0_7] : memref<32x768xf32, #tpu.memory_space<vmem>>, vector<32x768xf32>
    tpu.vector_store %arg9[%c0_6, %c0_7], %8 {strides = array<i32>} : memref<32x768xf32, #tpu.memory_space<vmem>>, vector<32x768xf32>,
    %c0_8 = arith.constant 0 : index
    %c0_9 = arith.constant 0 : index
    %10 = vector.load %arg3[%c0_8, %c0_9] : memref<256x768xf32, #tpu.memory_space<vmem>>, vector<256x768xf32>
    %c0_10 = arith.constant 0 : index
    %c0_11 = arith.constant 0 : index
    %11 = vector.load %arg5[%c0_10, %c0_11] : memref<1x768xf32, #tpu.memory_space<vmem>>, vector<1x768xf32>
    %12 = vector.shape_cast %11 : vector<1x768xf32> to vector<1x768xf32>
    %13 = vector.broadcast %12 : vector<1x768xf32> to vector<8x768xf32>
    %c0_12 = arith.constant 0 : index
    %c0_13 = arith.constant 0 : index
    %14 = vector.load %arg10[%c0_12, %c0_13] : memref<8x256xf32, #tpu.memory_space<vmem>>, vector<8x256xf32>
    %c0_i32_14 = arith.constant 0 : i32
    %c8_i32 = arith.constant 8 : i32
    %15 = arith.muli %c0_i32_14, %c8_i32 : i32
    %16 = tpu.assume_multiple %15, 8 : i32
    %17 = arith.index_cast %16 : i32 to index
    %c0_15 = arith.constant 0 : index
    %18 = vector.load %arg9[%17, %c0_15] : memref<32x768xf32, #tpu.memory_space<vmem>>, vector<8x768xf32>
    %cst_16 = arith.constant dense<0.000000e+00> : vector<8x768xf32>
    %19 = tpu.matmul %14, %10, %cst_16 {dimension_numbers = #tpu.dot_dimension_numbers<[1], [0], [0], [1], [0, 0, 1, 1], [], []>} : vector<8x256xf32>, vector<256x768xf32>, vector<8x768xf32> -> vector<8x768xf32>
    %20 = arith.addf %19, %13 : vector<8x768xf32>
    %21 = vector.extract_strided_slice %18 {offsets = [0, 0], sizes = [8, 256], strides = [1, 1]} : vector<8x768xf32> to vector<8x256xf32>
    %22 = vector.extract_strided_slice %20 {offsets = [0, 0], sizes = [8, 256], strides = [1, 1]} : vector<8x768xf32> to vector<8x256xf32>
    %23 = arith.addf %21, %22 : vector<8x256xf32>
    %24 = arith.negf %23 : vector<8x256xf32>
    %25 = math.exp %24 : vector<8x256xf32>
    %cst_17 = arith.constant 1.000000e+00 : f32
    %26 = vector.broadcast %cst_17 : f32 to vector<8x256xf32>
    %27 = arith.addf %26, %25 : vector<8x256xf32>
    %28 = arith.divf %26, %27 : vector<8x256xf32>
    %29 = vector.extract_strided_slice %18 {offsets = [0, 256], sizes = [8, 256], strides = [1, 1]} : vector<8x768xf32> to vector<8x256xf32>
    %30 = vector.extract_strided_slice %20 {offsets = [0, 256], sizes = [8, 256], strides = [1, 1]} : vector<8x768xf32> to vector<8x256xf32>
    %31 = arith.addf %29, %30 : vector<8x256xf32>
    %32 = arith.negf %31 : vector<8x256xf32>
    %33 = math.exp %32 : vector<8x256xf32>
    %cst_18 = arith.constant 1.000000e+00 : f32
    %34 = vector.broadcast %cst_18 : f32 to vector<8x256xf32>
    %35 = arith.addf %34, %33 : vector<8x256xf32>
    %36 = arith.divf %34, %35 : vector<8x256xf32>
    %37 = vector.extract_strided_slice %18 {offsets = [0, 512], sizes = [8, 256], strides = [1, 1]} : vector<8x768xf32> to vector<8x256xf32>
    %38 = vector.extract_strided_slice %20 {offsets = [0, 512], sizes = [8, 256], strides = [1, 1]} : vector<8x768xf32> to vector<8x256xf32>
    %39 = arith.mulf %28, %38 : vector<8x256xf32>
    %40 = arith.addf %37, %39 : vector<8x256xf32>
    %41 = math.tanh %40 : vector<8x256xf32>
    %cst_19 = arith.constant 1.000000e+00 : f32
    %42 = vector.broadcast %cst_19 : f32 to vector<8x256xf32>
    %43 = arith.subf %42, %36 : vector<8x256xf32>
    %44 = arith.mulf %43, %41 : vector<8x256xf32>
    %45 = arith.mulf %36, %14 : vector<8x256xf32>
    %46 = arith.addf %44, %45 : vector<8x256xf32>
    %47 = vector.extract_strided_slice %46 {offsets = [0, 0], sizes = [8, 128], strides = [1, 1]} : vector<8x256xf32> to vector<8x128xf32>
    %48 = arith.index_cast %c0_i32_14 : i32 to index
    %c0_20 = arith.constant 0 : index
    %c0_21 = arith.constant 0 : index
    %49 = vector.load %arg6[%48, %c0_20, %c0_21] : memref<4x8x128xf32, #tpu.memory_space<vmem>>, vector<1x8x128xf32>
    %50 = vector.shape_cast %49 : vector<1x8x128xf32> to vector<8x128xf32>
    %51 = vector.shape_cast %47 : vector<8x128xf32> to vector<1x8x128xf32>
    tpu.vector_store %arg6[%48, %c0_20, %c0_21], %51 {strides = array<i32>} : memref<4x8x128xf32, #tpu.memory_space<vmem>>, vector<1x8x128xf32>,
    %52 = vector.extract_strided_slice %46 {offsets = [0, 128], sizes = [8, 128], strides = [1, 1]} : vector<8x256xf32> to vector<8x128xf32>
    %c3_i32 = arith.constant 3 : i32
    %53 = arith.subi %c3_i32, %c0_i32_14 : i32
    %54 = arith.index_cast %53 : i32 to index
    %c0_22 = arith.constant 0 : index
    %c0_23 = arith.constant 0 : index
    %55 = vector.load %arg7[%54, %c0_22, %c0_23] : memref<4x8x128xf32, #tpu.memory_space<vmem>>, vector<1x8x128xf32>
    %56 = vector.shape_cast %55 : vector<1x8x128xf32> to vector<8x128xf32>
    %57 = vector.shape_cast %52 : vector<8x128xf32> to vector<1x8x128xf32>
    tpu.vector_store %arg7[%54, %c0_22, %c0_23], %57 {strides = array<i32>} : memref<4x8x128xf32, #tpu.memory_space<vmem>>, vector<1x8x128xf32>,
    %c1_i32 = arith.constant 1 : i32
    %c8_i32_24 = arith.constant 8 : i32
    %58 = arith.muli %c1_i32, %c8_i32_24 : i32
    %59 = tpu.assume_multiple %58, 8 : i32
    %60 = arith.index_cast %59 : i32 to index
    %c0_25 = arith.constant 0 : index
    %61 = vector.load %arg9[%60, %c0_25] : memref<32x768xf32, #tpu.memory_space<vmem>>, vector<8x768xf32>
    %cst_26 = arith.constant dense<0.000000e+00> : vector<8x768xf32>
    %62 = tpu.matmul %46, %10, %cst_26 {dimension_numbers = #tpu.dot_dimension_numbers<[1], [0], [0], [1], [0, 0, 1, 1], [], []>} : vector<8x256xf32>, vector<256x768xf32>, vector<8x768xf32> -> vector<8x768xf32>
    %63 = arith.addf %62, %13 : vector<8x768xf32>
    %64 = vector.extract_strided_slice %61 {offsets = [0, 0], sizes = [8, 256], strides = [1, 1]} : vector<8x768xf32> to vector<8x256xf32>
    %65 = vector.extract_strided_slice %63 {offsets = [0, 0], sizes = [8, 256], strides = [1, 1]} : vector<8x768xf32> to vector<8x256xf32>
    %66 = arith.addf %64, %65 : vector<8x256xf32>
    %67 = arith.negf %66 : vector<8x256xf32>
    %68 = math.exp %67 : vector<8x256xf32>
    %cst_27 = arith.constant 1.000000e+00 : f32
    %69 = vector.broadcast %cst_27 : f32 to vector<8x256xf32>
    %70 = arith.addf %69, %68 : vector<8x256xf32>
    %71 = arith.divf %69, %70 : vector<8x256xf32>
    %72 = vector.extract_strided_slice %61 {offsets = [0, 256], sizes = [8, 256], strides = [1, 1]} : vector<8x768xf32> to vector<8x256xf32>
    %73 = vector.extract_strided_slice %63 {offsets = [0, 256], sizes = [8, 256], strides = [1, 1]} : vector<8x768xf32> to vector<8x256xf32>
    %74 = arith.addf %72, %73 : vector<8x256xf32>
    %75 = arith.negf %74 : vector<8x256xf32>
    %76 = math.exp %75 : vector<8x256xf32>
    %cst_28 = arith.constant 1.000000e+00 : f32
    %77 = vector.broadcast %cst_28 : f32 to vector<8x256xf32>
    %78 = arith.addf %77, %76 : vector<8x256xf32>
    %79 = arith.divf %77, %78 : vector<8x256xf32>
    %80 = vector.extract_strided_slice %61 {offsets = [0, 512], sizes = [8, 256], strides = [1, 1]} : vector<8x768xf32> to vector<8x256xf32>
    %81 = vector.extract_strided_slice %63 {offsets = [0, 512], sizes = [8, 256], strides = [1, 1]} : vector<8x768xf32> to vector<8x256xf32>
    %82 = arith.mulf %71, %81 : vector<8x256xf32>
    %83 = arith.addf %80, %82 : vector<8x256xf32>
    %84 = math.tanh %83 : vector<8x256xf32>
    %cst_29 = arith.constant 1.000000e+00 : f32
    %85 = vector.broadcast %cst_29 : f32 to vector<8x256xf32>
    %86 = arith.subf %85, %79 : vector<8x256xf32>
    %87 = arith.mulf %86, %84 : vector<8x256xf32>
    %88 = arith.mulf %79, %46 : vector<8x256xf32>
    %89 = arith.addf %87, %88 : vector<8x256xf32>
    %90 = vector.extract_strided_slice %89 {offsets = [0, 0], sizes = [8, 128], strides = [1, 1]} : vector<8x256xf32> to vector<8x128xf32>
    %91 = arith.index_cast %c1_i32 : i32 to index
    %c0_30 = arith.constant 0 : index
    %c0_31 = arith.constant 0 : index
    %92 = vector.load %arg6[%91, %c0_30, %c0_31] : memref<4x8x128xf32, #tpu.memory_space<vmem>>, vector<1x8x128xf32>
    %93 = vector.shape_cast %92 : vector<1x8x128xf32> to vector<8x128xf32>
    %94 = vector.shape_cast %90 : vector<8x128xf32> to vector<1x8x128xf32>
    tpu.vector_store %arg6[%91, %c0_30, %c0_31], %94 {strides = array<i32>} : memref<4x8x128xf32, #tpu.memory_space<vmem>>, vector<1x8x128xf32>,
    %95 = vector.extract_strided_slice %89 {offsets = [0, 128], sizes = [8, 128], strides = [1, 1]} : vector<8x256xf32> to vector<8x128xf32>
    %c3_i32_32 = arith.constant 3 : i32
    %96 = arith.subi %c3_i32_32, %c1_i32 : i32
    %97 = arith.index_cast %96 : i32 to index
    %c0_33 = arith.constant 0 : index
    %c0_34 = arith.constant 0 : index
    %98 = vector.load %arg7[%97, %c0_33, %c0_34] : memref<4x8x128xf32, #tpu.memory_space<vmem>>, vector<1x8x128xf32>
    %99 = vector.shape_cast %98 : vector<1x8x128xf32> to vector<8x128xf32>
    %100 = vector.shape_cast %95 : vector<8x128xf32> to vector<1x8x128xf32>
    tpu.vector_store %arg7[%97, %c0_33, %c0_34], %100 {strides = array<i32>} : memref<4x8x128xf32, #tpu.memory_space<vmem>>, vector<1x8x128xf32>,
    %c2_i32 = arith.constant 2 : i32
    %c8_i32_35 = arith.constant 8 : i32
    %101 = arith.muli %c2_i32, %c8_i32_35 : i32
    %102 = tpu.assume_multiple %101, 8 : i32
    %103 = arith.index_cast %102 : i32 to index
    %c0_36 = arith.constant 0 : index
    %104 = vector.load %arg9[%103, %c0_36] : memref<32x768xf32, #tpu.memory_space<vmem>>, vector<8x768xf32>
    %cst_37 = arith.constant dense<0.000000e+00> : vector<8x768xf32>
    %105 = tpu.matmul %89, %10, %cst_37 {dimension_numbers = #tpu.dot_dimension_numbers<[1], [0], [0], [1], [0, 0, 1, 1], [], []>} : vector<8x256xf32>, vector<256x768xf32>, vector<8x768xf32> -> vector<8x768xf32>
    %106 = arith.addf %105, %13 : vector<8x768xf32>
    %107 = vector.extract_strided_slice %104 {offsets = [0, 0], sizes = [8, 256], strides = [1, 1]} : vector<8x768xf32> to vector<8x256xf32>
    %108 = vector.extract_strided_slice %106 {offsets = [0, 0], sizes = [8, 256], strides = [1, 1]} : vector<8x768xf32> to vector<8x256xf32>
    %109 = arith.addf %107, %108 : vector<8x256xf32>
    %110 = arith.negf %109 : vector<8x256xf32>
    %111 = math.exp %110 : vector<8x256xf32>
    %cst_38 = arith.constant 1.000000e+00 : f32
    %112 = vector.broadcast %cst_38 : f32 to vector<8x256xf32>
    %113 = arith.addf %112, %111 : vector<8x256xf32>
    %114 = arith.divf %112, %113 : vector<8x256xf32>
    %115 = vector.extract_strided_slice %104 {offsets = [0, 256], sizes = [8, 256], strides = [1, 1]} : vector<8x768xf32> to vector<8x256xf32>
    %116 = vector.extract_strided_slice %106 {offsets = [0, 256], sizes = [8, 256], strides = [1, 1]} : vector<8x768xf32> to vector<8x256xf32>
    %117 = arith.addf %115, %116 : vector<8x256xf32>
    %118 = arith.negf %117 : vector<8x256xf32>
    %119 = math.exp %118 : vector<8x256xf32>
    %cst_39 = arith.constant 1.000000e+00 : f32
    %120 = vector.broadcast %cst_39 : f32 to vector<8x256xf32>
    %121 = arith.addf %120, %119 : vector<8x256xf32>
    %122 = arith.divf %120, %121 : vector<8x256xf32>
    %123 = vector.extract_strided_slice %104 {offsets = [0, 512], sizes = [8, 256], strides = [1, 1]} : vector<8x768xf32> to vector<8x256xf32>
    %124 = vector.extract_strided_slice %106 {offsets = [0, 512], sizes = [8, 256], strides = [1, 1]} : vector<8x768xf32> to vector<8x256xf32>
    %125 = arith.mulf %114, %124 : vector<8x256xf32>
    %126 = arith.addf %123, %125 : vector<8x256xf32>
    %127 = math.tanh %126 : vector<8x256xf32>
    %cst_40 = arith.constant 1.000000e+00 : f32
    %128 = vector.broadcast %cst_40 : f32 to vector<8x256xf32>
    %129 = arith.subf %128, %122 : vector<8x256xf32>
    %130 = arith.mulf %129, %127 : vector<8x256xf32>
    %131 = arith.mulf %122, %89 : vector<8x256xf32>
    %132 = arith.addf %130, %131 : vector<8x256xf32>
    %133 = vector.extract_strided_slice %132 {offsets = [0, 0], sizes = [8, 128], strides = [1, 1]} : vector<8x256xf32> to vector<8x128xf32>
    %134 = arith.index_cast %c2_i32 : i32 to index
    %c0_41 = arith.constant 0 : index
    %c0_42 = arith.constant 0 : index
    %135 = vector.load %arg6[%134, %c0_41, %c0_42] : memref<4x8x128xf32, #tpu.memory_space<vmem>>, vector<1x8x128xf32>
    %136 = vector.shape_cast %135 : vector<1x8x128xf32> to vector<8x128xf32>
    %137 = vector.shape_cast %133 : vector<8x128xf32> to vector<1x8x128xf32>
    tpu.vector_store %arg6[%134, %c0_41, %c0_42], %137 {strides = array<i32>} : memref<4x8x128xf32, #tpu.memory_space<vmem>>, vector<1x8x128xf32>,
    %138 = vector.extract_strided_slice %132 {offsets = [0, 128], sizes = [8, 128], strides = [1, 1]} : vector<8x256xf32> to vector<8x128xf32>
    %c3_i32_43 = arith.constant 3 : i32
    %139 = arith.subi %c3_i32_43, %c2_i32 : i32
    %140 = arith.index_cast %139 : i32 to index
    %c0_44 = arith.constant 0 : index
    %c0_45 = arith.constant 0 : index
    %141 = vector.load %arg7[%140, %c0_44, %c0_45] : memref<4x8x128xf32, #tpu.memory_space<vmem>>, vector<1x8x128xf32>
    %142 = vector.shape_cast %141 : vector<1x8x128xf32> to vector<8x128xf32>
    %143 = vector.shape_cast %138 : vector<8x128xf32> to vector<1x8x128xf32>
    tpu.vector_store %arg7[%140, %c0_44, %c0_45], %143 {strides = array<i32>} : memref<4x8x128xf32, #tpu.memory_space<vmem>>, vector<1x8x128xf32>,
    %c3_i32_46 = arith.constant 3 : i32
    %c8_i32_47 = arith.constant 8 : i32
    %144 = arith.muli %c3_i32_46, %c8_i32_47 : i32
    %145 = tpu.assume_multiple %144, 8 : i32
    %146 = arith.index_cast %145 : i32 to index
    %c0_48 = arith.constant 0 : index
    %147 = vector.load %arg9[%146, %c0_48] : memref<32x768xf32, #tpu.memory_space<vmem>>, vector<8x768xf32>
    %cst_49 = arith.constant dense<0.000000e+00> : vector<8x768xf32>
    %148 = tpu.matmul %132, %10, %cst_49 {dimension_numbers = #tpu.dot_dimension_numbers<[1], [0], [0], [1], [0, 0, 1, 1], [], []>} : vector<8x256xf32>, vector<256x768xf32>, vector<8x768xf32> -> vector<8x768xf32>
    %149 = arith.addf %148, %13 : vector<8x768xf32>
    %150 = vector.extract_strided_slice %147 {offsets = [0, 0], sizes = [8, 256], strides = [1, 1]} : vector<8x768xf32> to vector<8x256xf32>
    %151 = vector.extract_strided_slice %149 {offsets = [0, 0], sizes = [8, 256], strides = [1, 1]} : vector<8x768xf32> to vector<8x256xf32>
    %152 = arith.addf %150, %151 : vector<8x256xf32>
    %153 = arith.negf %152 : vector<8x256xf32>
    %154 = math.exp %153 : vector<8x256xf32>
    %cst_50 = arith.constant 1.000000e+00 : f32
    %155 = vector.broadcast %cst_50 : f32 to vector<8x256xf32>
    %156 = arith.addf %155, %154 : vector<8x256xf32>
    %157 = arith.divf %155, %156 : vector<8x256xf32>
    %158 = vector.extract_strided_slice %147 {offsets = [0, 256], sizes = [8, 256], strides = [1, 1]} : vector<8x768xf32> to vector<8x256xf32>
    %159 = vector.extract_strided_slice %149 {offsets = [0, 256], sizes = [8, 256], strides = [1, 1]} : vector<8x768xf32> to vector<8x256xf32>
    %160 = arith.addf %158, %159 : vector<8x256xf32>
    %161 = arith.negf %160 : vector<8x256xf32>
    %162 = math.exp %161 : vector<8x256xf32>
    %cst_51 = arith.constant 1.000000e+00 : f32
    %163 = vector.broadcast %cst_51 : f32 to vector<8x256xf32>
    %164 = arith.addf %163, %162 : vector<8x256xf32>
    %165 = arith.divf %163, %164 : vector<8x256xf32>
    %166 = vector.extract_strided_slice %147 {offsets = [0, 512], sizes = [8, 256], strides = [1, 1]} : vector<8x768xf32> to vector<8x256xf32>
    %167 = vector.extract_strided_slice %149 {offsets = [0, 512], sizes = [8, 256], strides = [1, 1]} : vector<8x768xf32> to vector<8x256xf32>
    %168 = arith.mulf %157, %167 : vector<8x256xf32>
    %169 = arith.addf %166, %168 : vector<8x256xf32>
    %170 = math.tanh %169 : vector<8x256xf32>
    %cst_52 = arith.constant 1.000000e+00 : f32
    %171 = vector.broadcast %cst_52 : f32 to vector<8x256xf32>
    %172 = arith.subf %171, %165 : vector<8x256xf32>
    %173 = arith.mulf %172, %170 : vector<8x256xf32>
    %174 = arith.mulf %165, %132 : vector<8x256xf32>
    %175 = arith.addf %173, %174 : vector<8x256xf32>
    %176 = vector.extract_strided_slice %175 {offsets = [0, 0], sizes = [8, 128], strides = [1, 1]} : vector<8x256xf32> to vector<8x128xf32>
    %177 = arith.index_cast %c3_i32_46 : i32 to index
    %c0_53 = arith.constant 0 : index
    %c0_54 = arith.constant 0 : index
    %178 = vector.load %arg6[%177, %c0_53, %c0_54] : memref<4x8x128xf32, #tpu.memory_space<vmem>>, vector<1x8x128xf32>
    %179 = vector.shape_cast %178 : vector<1x8x128xf32> to vector<8x128xf32>
    %180 = vector.shape_cast %176 : vector<8x128xf32> to vector<1x8x128xf32>
    tpu.vector_store %arg6[%177, %c0_53, %c0_54], %180 {strides = array<i32>} : memref<4x8x128xf32, #tpu.memory_space<vmem>>, vector<1x8x128xf32>,
    %181 = vector.extract_strided_slice %175 {offsets = [0, 128], sizes = [8, 128], strides = [1, 1]} : vector<8x256xf32> to vector<8x128xf32>
    %c3_i32_55 = arith.constant 3 : i32
    %182 = arith.subi %c3_i32_55, %c3_i32_46 : i32
    %183 = arith.index_cast %182 : i32 to index
    %c0_56 = arith.constant 0 : index
    %c0_57 = arith.constant 0 : index
    %184 = vector.load %arg7[%183, %c0_56, %c0_57] : memref<4x8x128xf32, #tpu.memory_space<vmem>>, vector<1x8x128xf32>
    %185 = vector.shape_cast %184 : vector<1x8x128xf32> to vector<8x128xf32>
    %186 = vector.shape_cast %181 : vector<8x128xf32> to vector<1x8x128xf32>
    tpu.vector_store %arg7[%183, %c0_56, %c0_57], %186 {strides = array<i32>} : memref<4x8x128xf32, #tpu.memory_space<vmem>>, vector<1x8x128xf32>,
    %c4_i32 = arith.constant 4 : i32
    %c0_58 = arith.constant 0 : index
    %c0_59 = arith.constant 0 : index
    %187 = vector.load %arg10[%c0_58, %c0_59] : memref<8x256xf32, #tpu.memory_space<vmem>>, vector<8x256xf32>
    tpu.vector_store %arg10[%c0_58, %c0_59], %175 {strides = array<i32>} : memref<8x256xf32, #tpu.memory_space<vmem>>, vector<8x256xf32>,
    %c1_i32_60 = arith.constant 1 : i32
    %188 = arith.cmpi eq, %arg0, %c1_i32_60 : i32
    %189 = arith.extui %188 : i1 to i32
    %c0_i32_61 = arith.constant 0 : i32
    %190 = arith.cmpi ne, %189, %c0_i32_61 : i32
    scf.if %190 {
      %c0_62 = arith.constant 0 : index
      %c0_63 = arith.constant 0 : index
      %191 = vector.load %arg10[%c0_62, %c0_63] : memref<8x256xf32, #tpu.memory_space<vmem>>, vector<8x256xf32>
      %c0_64 = arith.constant 0 : index
      %c0_65 = arith.constant 0 : index
      %192 = vector.load %arg8[%c0_64, %c0_65] : memref<8x256xf32, #tpu.memory_space<vmem>>, vector<8x256xf32>
      tpu.vector_store %arg8[%c0_64, %c0_65], %191 {strides = array<i32>} : memref<8x256xf32, #tpu.memory_space<vmem>>, vector<8x256xf32>,
    } else {
    }
    return
  }
  func.func @transform_0(%arg0: i32) -> (i32, i32) {
    %c0_i32 = arith.constant 0 : i32
    %c0_i32_0 = arith.constant 0 : i32
    return %arg0, %c0_i32 : i32, i32
  }
  func.func @transform_1(%arg0: i32) -> (i32, i32) {
    %c0_i32 = arith.constant 0 : i32
    %c0_i32_0 = arith.constant 0 : i32
    %c0_i32_1 = arith.constant 0 : i32
    return %c0_i32, %c0_i32_0 : i32, i32
  }
  func.func @transform_2(%arg0: i32) -> (i32, i32) {
    %c0_i32 = arith.constant 0 : i32
    %c0_i32_0 = arith.constant 0 : i32
    %c0_i32_1 = arith.constant 0 : i32
    return %c0_i32, %c0_i32_0 : i32, i32
  }
  func.func @transform_3(%arg0: i32) -> (i32, i32) {
    %c0_i32 = arith.constant 0 : i32
    %c0_i32_0 = arith.constant 0 : i32
    %c0_i32_1 = arith.constant 0 : i32
    return %c0_i32, %c0_i32_0 : i32, i32
  }
  func.func @transform_4(%arg0: i32) -> (i32, i32) {
    %c0_i32 = arith.constant 0 : i32
    %c0_i32_0 = arith.constant 0 : i32
    %c0_i32_1 = arith.constant 0 : i32
    return %c0_i32, %c0_i32_0 : i32, i32
  }
  func.func @transform_5(%arg0: i32) -> (i32, i32, i32) {
    %c0_i32 = arith.constant 0 : i32
    %c0_i32_0 = arith.constant 0 : i32
    %c0_i32_1 = arith.constant 0 : i32
    return %arg0, %c0_i32, %c0_i32_0 : i32, i32, i32
  }
  func.func @transform_6(%arg0: i32) -> (i32, i32, i32) {
    %c1_i32 = arith.constant 1 : i32
    %0 = arith.subi %c1_i32, %arg0 : i32
    %c0_i32 = arith.constant 0 : i32
    %c0_i32_0 = arith.constant 0 : i32
    %c0_i32_1 = arith.constant 0 : i32
    return %0, %c0_i32, %c0_i32_0 : i32, i32, i32
  }
  func.func @transform_7(%arg0: i32) -> (i32, i32) {
    %c0_i32 = arith.constant 0 : i32
    %c0_i32_0 = arith.constant 0 : i32
    %c0_i32_1 = arith.constant 0 : i32
    return %c0_i32, %c0_i32_0 : i32, i32
  }
}

</mosaic_0001>

<llo_original>
// kernel: encoder_forward.1
$region0: #{encoder_forward.1}
  #allocation0 [shape = 'u32[]', space=smem, size = 0x4, offset = 0x4, fixed_abs, tag = 'smem constant byte address 0x4 - core index']
  #allocation1 [shape = 'u32[144,128]{1,0:T(1,128)}', space=vmem, size = 0x12000, scoped, tag = 'internal scratch']
  #allocation2 [shape = 'f32[32,768]{1,0:T(8,128)}', space=vmem, size = 0x18000, scoped, tag = 'scratch operand']
  #allocation3 [shape = 'f32[8,256]{1,0:T(8,128)}', space=vmem, size = 0x2000, scoped, tag = 'scratch operand']
  %s0 = inlined_call_operand.vmem [shape: f32[64,16], index: 0, kind: input, shape index: {}]
  %s1 = inlined_call_operand.vmem [shape: f32[16,768], index: 1, kind: input, shape index: {}]
  %s2 = inlined_call_operand.vmem [shape: f32[256,768], index: 2, kind: input, shape index: {}]
  %s3 = inlined_call_operand.vmem [shape: f32[1,768], index: 3, kind: input, shape index: {}]
  %s4 = inlined_call_operand.vmem [shape: f32[1,768], index: 4, kind: input, shape index: {}]
  %s5 = inlined_call_operand.vmem [shape: f32[8,8,128], index: 5, kind: output, shape index: {0}]
  %s6 = inlined_call_operand.vmem [shape: f32[8,8,128], index: 6, kind: output, shape index: {1}]
  %s7 = inlined_call_operand.vmem [shape: f32[8,256], index: 7, kind: output, shape index: {2}]
  %8 = xla_tuple %s5, %s6, %s7
  %s9 = sld [smem:[#allocation0]]
  $region77: #{encoder_forward.1} parent=0
    _
  %s11 = ssub.s32 1, %s9
  %s12 = scalar_select 0, %s11, %s9
  loop: start=0, step=1, limit=4
  $region2: #{encoder_forward.1} parent=0 // loop_pre_header
    _
  $region3: #{encoder_forward.1} parent=0 // loop_header
    %s14 = sphi 0, %s18
    %p15 = scmp.ge.s32.totalorder %s14, 4
    %s24 = sphi 0, %s26
    %s27 = sphi 0, %s24
    %s28 = sphi 0, %s27
    %s44 = sphi 0, %s28
    %s48 = sphi 0, %s48
    %s50 = sphi 0, %s48
    %s51 = sphi 0, %s50
    %s65 = sphi 0, %s51
    %s69 = sphi 0, %s69
    %s71 = sphi 0, %s69
    %s72 = sphi 0, %s71
    %s86 = sphi 0, %s72
    %s90 = sphi 0, %s90
    %s92 = sphi 0, %s90
    %s93 = sphi 0, %s92
    %s107 = sphi 0, %s93
    %s111 = sphi 0, %s111
    %s113 = sphi 0, %s111
    %s114 = sphi 0, %s113
    %s128 = sphi 0, %s114
    %s134 = sphi 0, %s136
    %s137 = sphi 0, %s134
    %s138 = sphi 0, %s137
    %s154 = sphi 0, %s138
    %s162 = sphi 0, %s164
    %s165 = sphi 0, %s162
    %s166 = sphi 0, %s165
    %s182 = sphi 0, %s166
    %s186 = sphi 0, %s186
    %s188 = sphi 0, %s186
    %s189 = sphi 0, %s188
    %s203 = sphi 0, %s189
  $region4: #{encoder_forward.1} parent=0 // loop_header_branch
    %17 = sbr.rel (%p15) target = $region8
  $region5: #{encoder_forward.1} parent=0 // loop_body
    %s19 = ssub.s32 %s14, 1
    %s20 = ssub.s32 %s14, 2
    %s21 = sadd.s32 %s14, 1
    %s22 = ssub.s32 %s14, %s21
    %p23 = scmp.eq.s32.totalorder %s22, 0
    %s25 = sadd.s32 %s24, 1
    %s26 = scalar_select %p23, %s24, %s25
    %p29 = pneg %p23
    %p30 = scmp.eq.s32.totalorder %s14, 1
    %p31 = por %p29, %p30
    %p32 = scmp.ne.s32.totalorder %s24, %s27
    %p33 = scmp.eq.s32.totalorder %s14, 0
    %p34 = por %p32, %p33
    %p35 = scmp.ne.s32.totalorder %s24, %s27
    %p36 = scmp.eq.s32.totalorder %s19, 1
    %p37 = por %p35, %p36
    %p38 = scmp.ne.s32.totalorder %s27, %s28
    %p39 = scmp.eq.s32.totalorder %s19, 0
    %p40 = por %p38, %p39
    %p41 = scmp.ne.s32.totalorder %s27, %s28
    %p42 = scmp.eq.s32.totalorder %s20, 1
    %p43 = por %p41, %p42
    %p45 = scmp.ne.s32.totalorder %s28, %s44
    %p46 = scmp.eq.s32.totalorder %s20, 0
    %p47 = por %p45, %p46
    %s49 = sadd.s32 %s48, 1
    %p52 = scmp.eq.s32.totalorder %s14, 1
    %p53 = scmp.ne.s32.totalorder %s48, %s50
    %p54 = scmp.eq.s32.totalorder %s14, 0
    %p55 = por %p53, %p54
    %p56 = scmp.ne.s32.totalorder %s48, %s50
    %p57 = scmp.eq.s32.totalorder %s19, 1
    %p58 = por %p56, %p57
    %p59 = scmp.ne.s32.totalorder %s50, %s51
    %p60 = scmp.eq.s32.totalorder %s19, 0
    %p61 = por %p59, %p60
    %p62 = scmp.ne.s32.totalorder %s50, %s51
    %p63 = scmp.eq.s32.totalorder %s20, 1
    %p64 = por %p62, %p63
    %p66 = scmp.ne.s32.totalorder %s51, %s65
    %p67 = scmp.eq.s32.totalorder %s20, 0
    %p68 = por %p66, %p67
    %s70 = sadd.s32 %s69, 1
    %p73 = scmp.eq.s32.totalorder %s14, 1
    %p74 = scmp.ne.s32.totalorder %s69, %s71
    %p75 = scmp.eq.s32.totalorder %s14, 0
    %p76 = por %p74, %p75
    %p77 = scmp.ne.s32.totalorder %s69, %s71
    %p78 = scmp.eq.s32.totalorder %s19, 1
    %p79 = por %p77, %p78
    %p80 = scmp.ne.s32.totalorder %s71, %s72
    %p81 = scmp.eq.s32.totalorder %s19, 0
    %p82 = por %p80, %p81
    %p83 = scmp.ne.s32.totalorder %s71, %s72
    %p84 = scmp.eq.s32.totalorder %s20, 1
    %p85 = por %p83, %p84
    %p87 = scmp.ne.s32.totalorder %s72, %s86
    %p88 = scmp.eq.s32.totalorder %s20, 0
    %p89 = por %p87, %p88
    %s91 = sadd.s32 %s90, 1
    %p94 = scmp.eq.s32.totalorder %s14, 1
    %p95 = scmp.ne.s32.totalorder %s90, %s92
    %p96 = scmp.eq.s32.totalorder %s14, 0
    %p97 = por %p95, %p96
    %p98 = scmp.ne.s32.totalorder %s90, %s92
    %p99 = scmp.eq.s32.totalorder %s19, 1
    %p100 = por %p98, %p99
    %p101 = scmp.ne.s32.totalorder %s92, %s93
    %p102 = scmp.eq.s32.totalorder %s19, 0
    %p103 = por %p101, %p102
    %p104 = scmp.ne.s32.totalorder %s92, %s93
    %p105 = scmp.eq.s32.totalorder %s20, 1
    %p106 = por %p104, %p105
    %p108 = scmp.ne.s32.totalorder %s93, %s107
    %p109 = scmp.eq.s32.totalorder %s20, 0
    %p110 = por %p108, %p109
    %s112 = sadd.s32 %s111, 1
    %p115 = scmp.eq.s32.totalorder %s14, 1
    %p116 = scmp.ne.s32.totalorder %s111, %s113
    %p117 = scmp.eq.s32.totalorder %s14, 0
    %p118 = por %p116, %p117
    %p119 = scmp.ne.s32.totalorder %s111, %s113
    %p120 = scmp.eq.s32.totalorder %s19, 1
    %p121 = por %p119, %p120
    %p122 = scmp.ne.s32.totalorder %s113, %s114
    %p123 = scmp.eq.s32.totalorder %s19, 0
    %p124 = por %p122, %p123
    %p125 = scmp.ne.s32.totalorder %s113, %s114
    %p126 = scmp.eq.s32.totalorder %s20, 1
    %p127 = por %p125, %p126
    %p129 = scmp.ne.s32.totalorder %s114, %s128
    %p130 = scmp.eq.s32.totalorder %s20, 0
    %p131 = por %p129, %p130
    %s132 = ssub.s32 %s14, %s21
    %p133 = scmp.eq.s32.totalorder %s132, 0
    %s135 = sadd.s32 %s134, 1
    %s136 = scalar_select %p133, %s134, %s135
    %p139 = pneg %p133
    %p140 = scmp.eq.s32.totalorder %s14, 1
    %p141 = por %p139, %p140
    %p142 = scmp.ne.s32.totalorder %s134, %s137
    %p143 = scmp.eq.s32.totalorder %s14, 0
    %p144 = por %p142, %p143
    %p145 = scmp.ne.s32.totalorder %s134, %s137
    %p146 = scmp.eq.s32.totalorder %s19, 1
    %p147 = por %p145, %p146
    %p148 = scmp.ne.s32.totalorder %s137, %s138
    %p149 = scmp.eq.s32.totalorder %s19, 0
    %p150 = por %p148, %p149
    %p151 = scmp.ne.s32.totalorder %s137, %s138
    %p152 = scmp.eq.s32.totalorder %s20, 1
    %p153 = por %p151, %p152
    %p155 = scmp.ne.s32.totalorder %s138, %s154
    %p156 = scmp.eq.s32.totalorder %s20, 0
    %p157 = por %p155, %p156
    %s158 = ssub.s32 1, %s14
    %s159 = ssub.s32 1, %s21
    %s160 = ssub.s32 %s158, %s159
    %p161 = scmp.eq.s32.totalorder %s160, 0
    %s163 = sadd.s32 %s162, 1
    %s164 = scalar_select %p161, %s162, %s163
    %p167 = pneg %p161
    %p168 = scmp.eq.s32.totalorder %s14, 1
    %p169 = por %p167, %p168
    %p170 = scmp.ne.s32.totalorder %s162, %s165
    %p171 = scmp.eq.s32.totalorder %s14, 0
    %p172 = por %p170, %p171
    %p173 = scmp.ne.s32.totalorder %s162, %s165
    %p174 = scmp.eq.s32.totalorder %s19, 1
    %p175 = por %p173, %p174
    %p176 = scmp.ne.s32.totalorder %s165, %s166
    %p177 = scmp.eq.s32.totalorder %s19, 0
    %p178 = por %p176, %p177
    %p179 = scmp.ne.s32.totalorder %s165, %s166
    %p180 = scmp.eq.s32.totalorder %s20, 1
    %p181 = por %p179, %p180
    %p183 = scmp.ne.s32.totalorder %s166, %s182
    %p184 = scmp.eq.s32.totalorder %s20, 0
    %p185 = por %p183, %p184
    %s187 = sadd.s32 %s186, 1
    %p190 = scmp.eq.s32.totalorder %s14, 1
    %p191 = scmp.ne.s32.totalorder %s186, %s188
    %p192 = scmp.eq.s32.totalorder %s14, 0
    %p193 = por %p191, %p192
    %p194 = scmp.ne.s32.totalorder %s186, %s188
    %p195 = scmp.eq.s32.totalorder %s19, 1
    %p196 = por %p194, %p195
    %p197 = scmp.ne.s32.totalorder %s188, %s189
    %p198 = scmp.eq.s32.totalorder %s19, 0
    %p199 = por %p197, %p198
    %p200 = scmp.ne.s32.totalorder %s188, %s189
    %p201 = scmp.eq.s32.totalorder %s20, 1
    %p202 = por %p200, %p201
    %p204 = scmp.ne.s32.totalorder %s189, %s203
    %p205 = scmp.eq.s32.totalorder %s20, 0
    %p206 = por %p204, %p205
    %p207 = scmp.le.s32.totalorder 1, %s14
    %p208 = scmp.lt.s32.totalorder %s14, 3
    %p209 = pnand %p207, %p208
    %p210 = pneg %p209
    // Predicated region
    $region9: #{encoder_forward.1} parent=5 // pred_check
      _
    $region10: #{encoder_forward.1} parent=5 // pred_check_branch
      %212 = sbr.rel (%p209) target = $region12
    $region11: #{encoder_forward.1} parent=5 // pred_region
      %s213 = ssub.s32 %s14, 1
      // Predicated region
      $region13: #{encoder_forward.1} parent=11 // pred_check
        %p214 = pneg %p61
      $region14: #{encoder_forward.1} parent=11 // pred_check_branch
        %216 = sbr.rel (%p214) target = $region16
      $region15: #{encoder_forward.1} parent=11 // pred_region
        _
      $region16: #{encoder_forward.1} parent=11 // pred_fallthru
        _
      // Predicated region
      $region17: #{encoder_forward.1} parent=11 // pred_check
        %p217 = pneg %p82
      $region18: #{encoder_forward.1} parent=11 // pred_check_branch
        %219 = sbr.rel (%p217) target = $region20
      $region19: #{encoder_forward.1} parent=11 // pred_region
        _
      $region20: #{encoder_forward.1} parent=11 // pred_fallthru
        _
      // Predicated region
      $region21: #{encoder_forward.1} parent=11 // pred_check
        %p220 = pneg %p103
      $region22: #{encoder_forward.1} parent=11 // pred_check_branch
        %222 = sbr.rel (%p220) target = $region24
      $region23: #{encoder_forward.1} parent=11 // pred_region
        _
      $region24: #{encoder_forward.1} parent=11 // pred_fallthru
        _
      // Predicated region
      $region25: #{encoder_forward.1} parent=11 // pred_check
        %p223 = pneg %p124
      $region26: #{encoder_forward.1} parent=11 // pred_check_branch
        %225 = sbr.rel (%p223) target = $region28
      $region27: #{encoder_forward.1} parent=11 // pred_region
        _
      $region28: #{encoder_forward.1} parent=11 // pred_fallthru
        _
    $region12: #{encoder_forward.1} parent=5 // pred_fallthru
      _
    %p226 = scmp.lt.s32.totalorder %s14, 2
    // Predicated region
    $region29: #{encoder_forward.1} parent=5 // pred_check
      %p227 = pneg %p226
    $region30: #{encoder_forward.1} parent=5 // pred_check_branch
      %229 = sbr.rel (%p227) target = $region32
    $region31: #{encoder_forward.1} parent=5 // pred_region
      // Predicated region
      $region33: #{encoder_forward.1} parent=31 // pred_check
        %p230 = pneg %p34
      $region34: #{encoder_forward.1} parent=31 // pred_check_branch
        %232 = sbr.rel (%p230) target = $region36
      $region35: #{encoder_forward.1} parent=31 // pred_region
        %s233 = smul.u32 4, %s14
        %p234 = scmp.lt.s32.totalorder %s233, 7
        %s235 = scalar_select %p234, %s233, 7
        %s236 = smul.addr %s235, 8
        %s237 = scalar_lea.vmem %s0, %s236
        %s238 = smul.u32 4, %s14
      $region36: #{encoder_forward.1} parent=31 // pred_fallthru
        _
    $region32: #{encoder_forward.1} parent=5 // pred_fallthru
      _
    %p239 = scmp.le.s32.totalorder 1, %s14
    %p240 = scmp.lt.s32.totalorder %s14, 3
    %p241 = pnand %p239, %p240
    %p242 = pneg %p241
    // Predicated region
    $region37: #{encoder_forward.1} parent=5 // pred_check
      _
    $region38: #{encoder_forward.1} parent=5 // pred_check_branch
      %244 = sbr.rel (%p241) target = $region40
    $region39: #{encoder_forward.1} parent=5 // pred_region
      %s245 = ssub.s32 %s14, 1
      %s246 = smul.u32 4, %s19
      %p247 = scmp.lt.s32.totalorder %s246, 7
      %s248 = scalar_select %p247, %s246, 7
      %s249 = smul.addr %s248, 8
      %s250 = scalar_lea.vmem %s0, %s249
      %p251 = pneg %p40
      %p252 = pneg %p37
      %p253 = pneg %p61
      %p254 = pneg %p58
      %p255 = pneg %p82
      %p256 = pneg %p79
      %p257 = pneg %p103
      %p258 = pneg %p100
      %p259 = pneg %p124
      %p260 = pneg %p121
      %p261 = pneg %p150
      %p262 = pneg %p147
      %s263 = smul.u32 4, %s19
      %p264 = scmp.lt.s32.totalorder %s263, 7
      %s265 = scalar_select %p264, %s263, 7
      %s266 = smul.addr %s265, 8
      %s267 = scalar_lea.vmem %s5, %s266
      %p268 = pneg %p178
      %p269 = pneg %p175
      %s270 = ssub.s32 1, %s19
      %s271 = smul.u32 4, %s270
      %p272 = scmp.lt.s32.totalorder %s271, 7
      %s273 = scalar_select %p272, %s271, 7
      %s274 = smul.addr %s273, 8
      %s275 = scalar_lea.vmem %s6, %s274
      %p276 = pneg %p199
      %p277 = pneg %p196
      %s278 = smul.u32 4, %s19
      %p279 = scmp.lt.s32.totalorder %s278, 7
      %s280 = scalar_select %p279, %s278, 7
      %s281 = smul.addr %s280, 8
      %s282 = scalar_lea.vmem %s0, %s281
      %s283 = smul.u32 4, %s19
      %s284 = smul.u32 4, %s19
      %p285 = scmp.lt.s32.totalorder %s284, 7
      %s286 = scalar_select %p285, %s284, 7
      %s287 = smul.addr %s286, 8
      %s288 = scalar_lea.vmem %s5, %s287
      %s289 = smul.u32 4, %s19
      %s290 = ssub.s32 1, %s19
      %s291 = smul.u32 4, %s290
      %p292 = scmp.lt.s32.totalorder %s291, 7
      %s293 = scalar_select %p292, %s291, 7
      %s294 = smul.addr %s293, 8
      %s295 = scalar_lea.vmem %s6, %s294
      %s296 = ssub.s32 1, %s19
      %s297 = smul.u32 4, %s296
      %p298 = scmp.eq.s32.totalorder %s19, 0
      // Predicated region
      $region41: #{encoder_forward.1} parent=39 // pred_check
        %p299 = pneg %p298
      $region42: #{encoder_forward.1} parent=39 // pred_check_branch
        %301 = sbr.rel (%p299) target = $region44
      $region43: #{encoder_forward.1} parent=39 // pred_region
        %302 = vst [vmem:[#allocation3] sm:$0xff] 0.0
        %303 = vst [vmem:[#allocation3 + $0x8] sm:$0xff] 0.0
      $region44: #{encoder_forward.1} parent=39 // pred_fallthru
        _
      %v304 = vld [vmem:[%s282] sm:$0xff]
      %v305 = vld [vmem:[%s282 + $0x8] sm:$0xff]
      %v306 = vld [vmem:[%s282 + $0x10] sm:$0xff]
      %v307 = vld [vmem:[%s282 + $0x18] sm:$0xff]
      %v308 = vld [vmem:[%s1] sm:$0xff]
      %v309 = vld [vmem:[%s1 + $0x8] sm:$0xff]
      %v310 = vld [vmem:[%s1 + $0x10] sm:$0xff]
      %v311 = vld [vmem:[%s1 + $0x18] sm:$0xff]
      %v312 = vld [vmem:[%s1 + $0x20] sm:$0xff]
      %v313 = vld [vmem:[%s1 + $0x28] sm:$0xff]
      %v314 = vld [vmem:[%s1 + $0x30] sm:$0xff]
      %v315 = vld [vmem:[%s1 + $0x38] sm:$0xff]
      %v316 = vld [vmem:[%s1 + $0x40] sm:$0xff]
      %v317 = vld [vmem:[%s1 + $0x48] sm:$0xff]
      %v318 = vld [vmem:[%s1 + $0x50] sm:$0xff]
      %v319 = vld [vmem:[%s1 + $0x58] sm:$0xff]
      %v320 = vld [vmem:[%s3] sm:$0x3f]
      %v322 = vlaneseq
      %v323 = vshrl.u32 %v322, 7
      %v324 = vsub.s32 0, %v323
      %v325 = vrot.slane %v320, %v324
      %v326 = vlaneseq
      %v327 = vshrl.u32 %v326, 7
      %v328 = vsub.s32 1, %v327
      %v329 = vrot.slane %v320, %v328
      %v330 = vlaneseq
      %v331 = vshrl.u32 %v330, 7
      %v332 = vsub.s32 2, %v331
      %v333 = vrot.slane %v320, %v332
      %v334 = vlaneseq
      %v335 = vshrl.u32 %v334, 7
      %v336 = vsub.s32 3, %v335
      %v337 = vrot.slane %v320, %v336
      %v338 = vlaneseq
      %v339 = vshrl.u32 %v338, 7
      %v340 = vsub.s32 4, %v339
      %v341 = vrot.slane %v320, %v340
      %v342 = vlaneseq
      %v343 = vshrl.u32 %v342, 7
      %v344 = vsub.s32 5, %v343
      %v345 = vrot.slane %v320, %v344
      %vm352 = vcmask 130048
      %v354 = vsel %vm352, %v304, 0
      %v357 = vsel %vm352, %v305, 0
      %v360 = vsel %vm352, %v306, 0
      %v363 = vsel %vm352, %v307, 0
      %365 = vmatprep.subr.mxu0 0.0
      %366 = vmatpush1.msra.mxu0 0.0
      %367 = vmatprep.subr.mxu0 0.0
      %368 = vmatpush1.msra.mxu0 0.0
      %369 = vmatprep.subr.mxu0 0.0
      %370 = vmatpush1.msra.mxu0 0.0
      %371 = vmatprep.subr.mxu0 0.0
      %372 = vmatpush1.msra.mxu0 0.0
      %373 = vmatprep.subr.mxu0 0.0
      %374 = vmatpush1.msra.mxu0 0.0
      %375 = vmatprep.subr.mxu0 0.0
      %376 = vmatpush1.msra.mxu0 0.0
      %377 = vmatprep.subr.mxu0 0.0
      %378 = vmatpush1.msra.mxu0 0.0
      %379 = vmatprep.subr.mxu0 0.0
      %380 = vmatpush1.msra.mxu0 0.0
      %381 = vmatprep.subr.mxu0 0.0
      %382 = vmatpush1.msra.mxu0 0.0
      %383 = vmatprep.subr.mxu0 0.0
      %384 = vmatpush1.msra.mxu0 0.0
      %385 = vmatprep.subr.mxu0 0.0
      %386 = vmatpush1.msra.mxu0 0.0
      %387 = vmatprep.subr.mxu0 0.0
      %388 = vmatpush1.msra.mxu0 0.0
      %389 = vmatprep.subr.mxu0 0.0
      %390 = vmatpush1.msra.mxu0 0.0
      %391 = vmatprep.subr.mxu0 0.0
      %392 = vmatpush1.msra.mxu0 0.0
      %393 = vmatprep.subr.mxu0 %v315
      %394 = vmatpush1.msra.mxu0 %v314
      %395 = vmatprep.subr.mxu0 %v309
      %396 = vmatpush1.msra.mxu0 %v308
      %397 = vmatprep.subr.mxu0 0.0
      %398 = vmatpush2.msra.mxu0 0.0
      %399 = vmatprep.subr.mxu0 0.0
      %400 = vmatpush2.msra.mxu0 0.0
      %401 = vmatprep.subr.mxu0 0.0
      %402 = vmatpush2.msra.mxu0 0.0
      %403 = vmatprep.subr.mxu0 0.0
      %404 = vmatpush2.msra.mxu0 0.0
      %405 = vmatprep.subr.mxu0 0.0
      %406 = vmatpush2.msra.mxu0 0.0
      %407 = vmatprep.subr.mxu0 0.0
      %408 = vmatpush2.msra.mxu0 0.0
      %409 = vmatprep.subr.mxu0 0.0
      %410 = vmatpush2.msra.mxu0 0.0
      %411 = vmatprep.subr.mxu0 0.0
      %412 = vmatpush2.msra.mxu0 0.0
      %413 = vmatprep.subr.mxu0 0.0
      %414 = vmatpush2.msra.mxu0 0.0
      %415 = vmatprep.subr.mxu0 0.0
      %416 = vmatpush2.msra.mxu0 0.0
      %417 = vmatprep.subr.mxu0 0.0
      %418 = vmatpush2.msra.mxu0 0.0
      %419 = vmatprep.subr.mxu0 0.0
      %420 = vmatpush2.msra.mxu0 0.0
      %421 = vmatprep.subr.mxu0 0.0
      %422 = vmatpush2.msra.mxu0 0.0
      %423 = vmatprep.subr.mxu0 0.0
      %424 = vmatpush2.msra.mxu0 0.0
      %425 = vmatprep.subr.mxu0 0.0
      %426 = vmatpush2.msra.mxu0 0.0
      %427 = vmatprep.subr.mxu0 0.0
      %428 = vmatpush2.msra.mxu0 0.0
      %429 = vmatprep.mubr.f32.mxu0 0.0
      %430 = vmatmul.mubr.f32.gmra.mxu0 %v354
      %v431 = vpop.f32.mrf.mxu0
      %v432 = vadd.f32 %v325, %v431
      %v433 = vpop.f32.mrf.mxu0
      %v434 = vadd.f32 %v329, %v433
      %435 = vmatprep.mubr.f32.mxu0 0.0
      %436 = vmatmul.mubr.f32.gmra.mxu0 %v357
      %v437 = vpop.f32.mrf.mxu0
      %v438 = vadd.f32 %v325, %v437
      %v439 = vpop.f32.mrf.mxu0
      %v440 = vadd.f32 %v329, %v439
      %441 = vmatprep.mubr.f32.mxu0 0.0
      %442 = vmatmul.mubr.f32.gmra.mxu0 %v360
      %v443 = vpop.f32.mrf.mxu0
      %v444 = vadd.f32 %v325, %v443
      %v445 = vpop.f32.mrf.mxu0
      %v446 = vadd.f32 %v329, %v445
      %447 = vmatprep.mubr.f32.mxu0 0.0
      %448 = vmatmul.mubr.f32.gmra.mxu0 %v363
      %v449 = vpop.f32.mrf.mxu0
      %v450 = vadd.f32 %v325, %v449
      %v451 = vpop.f32.mrf.mxu0
      %v452 = vadd.f32 %v329, %v451
      %453 = vdwg.mxu0
      %454 = vmatprep.subr.mxu0 0.0
      %455 = vmatpush1.msra.mxu0 0.0
      %456 = vmatprep.subr.mxu0 0.0
      %457 = vmatpush1.msra.mxu0 0.0
      %458 = vmatprep.subr.mxu0 0.0
      %459 = vmatpush1.msra.mxu0 0.0
      %460 = vmatprep.subr.mxu0 0.0
      %461 = vmatpush1.msra.mxu0 0.0
      %462 = vmatprep.subr.mxu0 0.0
      %463 = vmatpush1.msra.mxu0 0.0
      %464 = vmatprep.subr.mxu0 0.0
      %465 = vmatpush1.msra.mxu0 0.0
      %466 = vmatprep.subr.mxu0 0.0
      %467 = vmatpush1.msra.mxu0 0.0
      %468 = vmatprep.subr.mxu0 0.0
      %469 = vmatpush1.msra.mxu0 0.0
      %470 = vmatprep.subr.mxu0 0.0
      %471 = vmatpush1.msra.mxu0 0.0
      %472 = vmatprep.subr.mxu0 0.0
      %473 = vmatpush1.msra.mxu0 0.0
      %474 = vmatprep.subr.mxu0 0.0
      %475 = vmatpush1.msra.mxu0 0.0
      %476 = vmatprep.subr.mxu0 0.0
      %477 = vmatpush1.msra.mxu0 0.0
      %478 = vmatprep.subr.mxu0 0.0
      %479 = vmatpush1.msra.mxu0 0.0
      %480 = vmatprep.subr.mxu0 0.0
      %481 = vmatpush1.msra.mxu0 0.0
      %482 = vmatprep.subr.mxu0 %v317
      %483 = vmatpush1.msra.mxu0 %v316
      %484 = vmatprep.subr.mxu0 %v311
      %485 = vmatpush1.msra.mxu0 %v310
      %486 = vmatprep.subr.mxu0 0.0
      %487 = vmatpush2.msra.mxu0 0.0
      %488 = vmatprep.subr.mxu0 0.0
      %489 = vmatpush2.msra.mxu0 0.0
      %490 = vmatprep.subr.mxu0 0.0
      %491 = vmatpush2.msra.mxu0 0.0
      %492 = vmatprep.subr.mxu0 0.0
      %493 = vmatpush2.msra.mxu0 0.0
      %494 = vmatprep.subr.mxu0 0.0
      %495 = vmatpush2.msra.mxu0 0.0
      %496 = vmatprep.subr.mxu0 0.0
      %497 = vmatpush2.msra.mxu0 0.0
      %498 = vmatprep.subr.mxu0 0.0
      %499 = vmatpush2.msra.mxu0 0.0
      %500 = vmatprep.subr.mxu0 0.0
      %501 = vmatpush2.msra.mxu0 0.0
      %502 = vmatprep.subr.mxu0 0.0
      %503 = vmatpush2.msra.mxu0 0.0
      %504 = vmatprep.subr.mxu0 0.0
      %505 = vmatpush2.msra.mxu0 0.0
      %506 = vmatprep.subr.mxu0 0.0
      %507 = vmatpush2.msra.mxu0 0.0
      %508 = vmatprep.subr.mxu0 0.0
      %509 = vmatpush2.msra.mxu0 0.0
      %510 = vmatprep.subr.mxu0 0.0
      %511 = vmatpush2.msra.mxu0 0.0
      %512 = vmatprep.subr.mxu0 0.0
      %513 = vmatpush2.msra.mxu0 0.0
      %514 = vmatprep.subr.mxu0 0.0
      %515 = vmatpush2.msra.mxu0 0.0
      %516 = vmatprep.subr.mxu0 0.0
      %517 = vmatpush2.msra.mxu0 0.0
      %518 = vmatprep.mubr.f32.mxu0 0.0
      %519 = vmatmul.mubr.f32.gmra.mxu0 %v354
      %v520 = vpop.f32.mrf.mxu0
      %v521 = vadd.f32 %v333, %v520
      %v522 = vpop.f32.mrf.mxu0
      %v523 = vadd.f32 %v337, %v522
      %524 = vmatprep.mubr.f32.mxu0 0.0
      %525 = vmatmul.mubr.f32.gmra.mxu0 %v357
      %v526 = vpop.f32.mrf.mxu0
      %v527 = vadd.f32 %v333, %v526
      %v528 = vpop.f32.mrf.mxu0
      %v529 = vadd.f32 %v337, %v528
      %530 = vmatprep.mubr.f32.mxu0 0.0
      %531 = vmatmul.mubr.f32.gmra.mxu0 %v360
      %v532 = vpop.f32.mrf.mxu0
      %v533 = vadd.f32 %v333, %v532
      %v534 = vpop.f32.mrf.mxu0
      %v535 = vadd.f32 %v337, %v534
      %536 = vmatprep.mubr.f32.mxu0 0.0
      %537 = vmatmul.mubr.f32.gmra.mxu0 %v363
      %v538 = vpop.f32.mrf.mxu0
      %v539 = vadd.f32 %v333, %v538
      %v540 = vpop.f32.mrf.mxu0
      %v541 = vadd.f32 %v337, %v540
      %542 = vdwg.mxu0
      %543 = vmatprep.subr.mxu0 0.0
      %544 = vmatpush1.msra.mxu0 0.0
      %545 = vmatprep.subr.mxu0 0.0
      %546 = vmatpush1.msra.mxu0 0.0
      %547 = vmatprep.subr.mxu0 0.0
      %548 = vmatpush1.msra.mxu0 0.0
      %549 = vmatprep.subr.mxu0 0.0
      %550 = vmatpush1.msra.mxu0 0.0
      %551 = vmatprep.subr.mxu0 0.0
      %552 = vmatpush1.msra.mxu0 0.0
      %553 = vmatprep.subr.mxu0 0.0
      %554 = vmatpush1.msra.mxu0 0.0
      %555 = vmatprep.subr.mxu0 0.0
      %556 = vmatpush1.msra.mxu0 0.0
      %557 = vmatprep.subr.mxu0 0.0
      %558 = vmatpush1.msra.mxu0 0.0
      %559 = vmatprep.subr.mxu0 0.0
      %560 = vmatpush1.msra.mxu0 0.0
      %561 = vmatprep.subr.mxu0 0.0
      %562 = vmatpush1.msra.mxu0 0.0
      %563 = vmatprep.subr.mxu0 0.0
      %564 = vmatpush1.msra.mxu0 0.0
      %565 = vmatprep.subr.mxu0 0.0
      %566 = vmatpush1.msra.mxu0 0.0
      %567 = vmatprep.subr.mxu0 0.0
      %568 = vmatpush1.msra.mxu0 0.0
      %569 = vmatprep.subr.mxu0 0.0
      %570 = vmatpush1.msra.mxu0 0.0
      %571 = vmatprep.subr.mxu0 %v319
      %572 = vmatpush1.msra.mxu0 %v318
      %573 = vmatprep.subr.mxu0 %v313
      %574 = vmatpush1.msra.mxu0 %v312
      %575 = vmatprep.subr.mxu0 0.0
      %576 = vmatpush2.msra.mxu0 0.0
      %577 = vmatprep.subr.mxu0 0.0
      %578 = vmatpush2.msra.mxu0 0.0
      %579 = vmatprep.subr.mxu0 0.0
      %580 = vmatpush2.msra.mxu0 0.0
      %581 = vmatprep.subr.mxu0 0.0
      %582 = vmatpush2.msra.mxu0 0.0
      %583 = vmatprep.subr.mxu0 0.0
      %584 = vmatpush2.msra.mxu0 0.0
      %585 = vmatprep.subr.mxu0 0.0
      %586 = vmatpush2.msra.mxu0 0.0
      %587 = vmatprep.subr.mxu0 0.0
      %588 = vmatpush2.msra.mxu0 0.0
      %589 = vmatprep.subr.mxu0 0.0
      %590 = vmatpush2.msra.mxu0 0.0
      %591 = vmatprep.subr.mxu0 0.0
      %592 = vmatpush2.msra.mxu0 0.0
      %593 = vmatprep.subr.mxu0 0.0
      %594 = vmatpush2.msra.mxu0 0.0
      %595 = vmatprep.subr.mxu0 0.0
      %596 = vmatpush2.msra.mxu0 0.0
      %597 = vmatprep.subr.mxu0 0.0
      %598 = vmatpush2.msra.mxu0 0.0
      %599 = vmatprep.subr.mxu0 0.0
      %600 = vmatpush2.msra.mxu0 0.0
      %601 = vmatprep.subr.mxu0 0.0
      %602 = vmatpush2.msra.mxu0 0.0
      %603 = vmatprep.subr.mxu0 0.0
      %604 = vmatpush2.msra.mxu0 0.0
      %605 = vmatprep.subr.mxu0 0.0
      %606 = vmatpush2.msra.mxu0 0.0
      %607 = vmatprep.mubr.f32.mxu0 0.0
      %608 = vmatmul.mubr.f32.gmra.mxu0 %v354
      %v609 = vpop.f32.mrf.mxu0
      %v610 = vadd.f32 %v341, %v609
      %v611 = vpop.f32.mrf.mxu0
      %v612 = vadd.f32 %v345, %v611
      %613 = vmatprep.mubr.f32.mxu0 0.0
      %614 = vmatmul.mubr.f32.gmra.mxu0 %v357
      %v615 = vpop.f32.mrf.mxu0
      %v616 = vadd.f32 %v341, %v615
      %v617 = vpop.f32.mrf.mxu0
      %v618 = vadd.f32 %v345, %v617
      %619 = vmatprep.mubr.f32.mxu0 0.0
      %620 = vmatmul.mubr.f32.gmra.mxu0 %v360
      %v621 = vpop.f32.mrf.mxu0
      %v622 = vadd.f32 %v341, %v621
      %v623 = vpop.f32.mrf.mxu0
      %v624 = vadd.f32 %v345, %v623
      %625 = vmatprep.mubr.f32.mxu0 0.0
      %626 = vmatmul.mubr.f32.gmra.mxu0 %v363
      %v627 = vpop.f32.mrf.mxu0
      %v628 = vadd.f32 %v341, %v627
      %v629 = vpop.f32.mrf.mxu0
      %v630 = vadd.f32 %v345, %v629
      %631 = vdwg.mxu0
      %632 = vst [vmem:[#allocation2] sm:$0xff] %v432
      %633 = vst [vmem:[#allocation2 + $0x8] sm:$0xff] %v434
      %634 = vst [vmem:[#allocation2 + $0x10] sm:$0xff] %v521
      %635 = vst [vmem:[#allocation2 + $0x18] sm:$0xff] %v523
      %636 = vst [vmem:[#allocation2 + $0x20] sm:$0xff] %v610
      %637 = vst [vmem:[#allocation2 + $0x28] sm:$0xff] %v612
      %638 = vst [vmem:[#allocation2 + $0x30] sm:$0xff] %v438
      %639 = vst [vmem:[#allocation2 + $0x38] sm:$0xff] %v440
      %640 = vst [vmem:[#allocation2 + $0x40] sm:$0xff] %v527
      %641 = vst [vmem:[#allocation2 + $0x48] sm:$0xff] %v529
      %642 = vst [vmem:[#allocation2 + $0x50] sm:$0xff] %v616
      %643 = vst [vmem:[#allocation2 + $0x58] sm:$0xff] %v618
      %644 = vst [vmem:[#allocation2 + $0x60] sm:$0xff] %v444
      %645 = vst [vmem:[#allocation2 + $0x68] sm:$0xff] %v446
      %646 = vst [vmem:[#allocation2 + $0x70] sm:$0xff] %v533
      %647 = vst [vmem:[#allocation2 + $0x78] sm:$0xff] %v535
      %648 = vst [vmem:[#allocation2 + $0x80] sm:$0xff] %v622
      %649 = vst [vmem:[#allocation2 + $0x88] sm:$0xff] %v624
      %650 = vst [vmem:[#allocation2 + $0x90] sm:$0xff] %v450
      %651 = vst [vmem:[#allocation2 + $0x98] sm:$0xff] %v452
      %652 = vst [vmem:[#allocation2 + $0xa0] sm:$0xff] %v539
      %653 = vst [vmem:[#allocation2 + $0xa8] sm:$0xff] %v541
      %654 = vst [vmem:[#allocation2 + $0xb0] sm:$0xff] %v628
      %655 = vst [vmem:[#allocation2 + $0xb8] sm:$0xff] %v630
      %v656 = vld [vmem:[%s2] sm:$0xff]
      %v657 = vld [vmem:[%s2 + $0x8] sm:$0xff]
      %v658 = vld [vmem:[%s2 + $0x10] sm:$0xff]
      %v659 = vld [vmem:[%s2 + $0x18] sm:$0xff]
      %v660 = vld [vmem:[%s2 + $0x20] sm:$0xff]
      %v661 = vld [vmem:[%s2 + $0x28] sm:$0xff]
      %v662 = vld [vmem:[%s2 + $0x30] sm:$0xff]
      %v663 = vld [vmem:[%s2 + $0x38] sm:$0xff]
      %v664 = vld [vmem:[%s2 + $0x40] sm:$0xff]
      %v665 = vld [vmem:[%s2 + $0x48] sm:$0xff]
      %v666 = vld [vmem:[%s2 + $0x50] sm:$0xff]
      %v667 = vld [vmem:[%s2 + $0x58] sm:$0xff]
      %v668 = vld [vmem:[%s2 + $0x60] sm:$0xff]
      %v669 = vld [vmem:[%s2 + $0x68] sm:$0xff]
      %v670 = vld [vmem:[%s2 + $0x70] sm:$0xff]
      %v671 = vld [vmem:[%s2 + $0x78] sm:$0xff]
      %v672 = vld [vmem:[%s2 + $0x80] sm:$0xff]
      %v673 = vld [vmem:[%s2 + $0x88] sm:$0xff]
      %v674 = vld [vmem:[%s2 + $0x90] sm:$0xff]
      %v675 = vld [vmem:[%s2 + $0x98] sm:$0xff]
      %v676 = vld [vmem:[%s2 + $0xa0] sm:$0xff]
      %v677 = vld [vmem:[%s2 + $0xa8] sm:$0xff]
      %v678 = vld [vmem:[%s2 + $0xb0] sm:$0xff]
      %v679 = vld [vmem:[%s2 + $0xb8] sm:$0xff]
      %v680 = vld [vmem:[%s2 + $0xc0] sm:$0xff]
      %v681 = vld [vmem:[%s2 + $0xc8] sm:$0xff]
      %v682 = vld [vmem:[%s2 + $0xd0] sm:$0xff]
      %v683 = vld [vmem:[%s2 + $0xd8] sm:$0xff]
      %v684 = vld [vmem:[%s2 + $0xe0] sm:$0xff]
      %v685 = vld [vmem:[%s2 + $0xe8] sm:$0xff]
      %v686 = vld [vmem:[%s2 + $0xf0] sm:$0xff]
      %v687 = vld [vmem:[%s2 + $0xf8] sm:$0xff]
      %v688 = vld [vmem:[%s2 + $0x100] sm:$0xff]
      %v689 = vld [vmem:[%s2 + $0x108] sm:$0xff]
      %v690 = vld [vmem:[%s2 + $0x110] sm:$0xff]
      %v691 = vld [vmem:[%s2 + $0x118] sm:$0xff]
      %v692 = vld [vmem:[%s2 + $0x120] sm:$0xff]
      %v693 = vld [vmem:[%s2 + $0x128] sm:$0xff]
      %v694 = vld [vmem:[%s2 + $0x130] sm:$0xff]
      %v695 = vld [vmem:[%s2 + $0x138] sm:$0xff]
      %v696 = vld [vmem:[%s2 + $0x140] sm:$0xff]
      %v697 = vld [vmem:[%s2 + $0x148] sm:$0xff]
      %v698 = vld [vmem:[%s2 + $0x150] sm:$0xff]
      %v699 = vld [vmem:[%s2 + $0x158] sm:$0xff]
      %v700 = vld [vmem:[%s2 + $0x160] sm:$0xff]
      %v701 = vld [vmem:[%s2 + $0x168] sm:$0xff]
      %v702 = vld [vmem:[%s2 + $0x170] sm:$0xff]
      %v703 = vld [vmem:[%s2 + $0x178] sm:$0xff]
      %v704 = vld [vmem:[%s2 + $0x180] sm:$0xff]
      %v705 = vld [vmem:[%s2 + $0x188] sm:$0xff]
      %v706 = vld [vmem:[%s2 + $0x190] sm:$0xff]
      %v707 = vld [vmem:[%s2 + $0x198] sm:$0xff]
      %v708 = vld [vmem:[%s2 + $0x1a0] sm:$0xff]
      %v709 = vld [vmem:[%s2 + $0x1a8] sm:$0xff]
      %v710 = vld [vmem:[%s2 + $0x1b0] sm:$0xff]
      %v711 = vld [vmem:[%s2 + $0x1b8] sm:$0xff]
      %v712 = vld [vmem:[%s2 + $0x1c0] sm:$0xff]
      %v713 = vld [vmem:[%s2 + $0x1c8] sm:$0xff]
      %v714 = vld [vmem:[%s2 + $0x1d0] sm:$0xff]
      %v715 = vld [vmem:[%s2 + $0x1d8] sm:$0xff]
      %v716 = vld [vmem:[%s2 + $0x1e0] sm:$0xff]
      %v717 = vld [vmem:[%s2 + $0x1e8] sm:$0xff]
      %v718 = vld [vmem:[%s2 + $0x1f0] sm:$0xff]
      %v719 = vld [vmem:[%s2 + $0x1f8] sm:$0xff]
      %v720 = vld [vmem:[%s2 + $0x200] sm:$0xff]
      %v721 = vld [vmem:[%s2 + $0x208] sm:$0xff]
      %v722 = vld [vmem:[%s2 + $0x210] sm:$0xff]
      %v723 = vld [vmem:[%s2 + $0x218] sm:$0xff]
      %v724 = vld [vmem:[%s2 + $0x220] sm:$0xff]
      %v725 = vld [vmem:[%s2 + $0x228] sm:$0xff]
      %v726 = vld [vmem:[%s2 + $0x230] sm:$0xff]
      %v727 = vld [vmem:[%s2 + $0x238] sm:$0xff]
      %v728 = vld [vmem:[%s2 + $0x240] sm:$0xff]
      %v729 = vld [vmem:[%s2 + $0x248] sm:$0xff]
      %v730 = vld [vmem:[%s2 + $0x250] sm:$0xff]
      %v731 = vld [vmem:[%s2 + $0x258] sm:$0xff]
      %v732 = vld [vmem:[%s2 + $0x260] sm:$0xff]
      %v733 = vld [vmem:[%s2 + $0x268] sm:$0xff]
      %v734 = vld [vmem:[%s2 + $0x270] sm:$0xff]
      %v735 = vld [vmem:[%s2 + $0x278] sm:$0xff]
      %v736 = vld [vmem:[%s2 + $0x280] sm:$0xff]
      %v737 = vld [vmem:[%s2 + $0x288] sm:$0xff]
      %v738 = vld [vmem:[%s2 + $0x290] sm:$0xff]
      %v739 = vld [vmem:[%s2 + $0x298] sm:$0xff]
      %v740 = vld [vmem:[%s2 + $0x2a0] sm:$0xff]
      %v741 = vld [vmem:[%s2 + $0x2a8] sm:$0xff]
      %v742 = vld [vmem:[%s2 + $0x2b0] sm:$0xff]
      %v743 = vld [vmem:[%s2 + $0x2b8] sm:$0xff]
      %v744 = vld [vmem:[%s2 + $0x2c0] sm:$0xff]
      %v745 = vld [vmem:[%s2 + $0x2c8] sm:$0xff]
      %v746 = vld [vmem:[%s2 + $0x2d0] sm:$0xff]
      %v747 = vld [vmem:[%s2 + $0x2d8] sm:$0xff]
      %v748 = vld [vmem:[%s2 + $0x2e0] sm:$0xff]
      %v749 = vld [vmem:[%s2 + $0x2e8] sm:$0xff]
      %v750 = vld [vmem:[%s2 + $0x2f0] sm:$0xff]
      %v751 = vld [vmem:[%s2 + $0x2f8] sm:$0xff]
      %v752 = vld [vmem:[%s2 + $0x300] sm:$0xff]
      %v753 = vld [vmem:[%s2 + $0x308] sm:$0xff]
      %v754 = vld [vmem:[%s2 + $0x310] sm:$0xff]
      %v755 = vld [vmem:[%s2 + $0x318] sm:$0xff]
      %v756 = vld [vmem:[%s2 + $0x320] sm:$0xff]
      %v757 = vld [vmem:[%s2 + $0x328] sm:$0xff]
      %v758 = vld [vmem:[%s2 + $0x330] sm:$0xff]
      %v759 = vld [vmem:[%s2 + $0x338] sm:$0xff]
      %v760 = vld [vmem:[%s2 + $0x340] sm:$0xff]
      %v761 = vld [vmem:[%s2 + $0x348] sm:$0xff]
      %v762 = vld [vmem:[%s2 + $0x350] sm:$0xff]
      %v763 = vld [vmem:[%s2 + $0x358] sm:$0xff]
      %v764 = vld [vmem:[%s2 + $0x360] sm:$0xff]
      %v765 = vld [vmem:[%s2 + $0x368] sm:$0xff]
      %v766 = vld [vmem:[%s2 + $0x370] sm:$0xff]
      %v767 = vld [vmem:[%s2 + $0x378] sm:$0xff]
      %v768 = vld [vmem:[%s2 + $0x380] sm:$0xff]
      %v769 = vld [vmem:[%s2 + $0x388] sm:$0xff]
      %v770 = vld [vmem:[%s2 + $0x390] sm:$0xff]
      %v771 = vld [vmem:[%s2 + $0x398] sm:$0xff]
      %v772 = vld [vmem:[%s2 + $0x3a0] sm:$0xff]
      %v773 = vld [vmem:[%s2 + $0x3a8] sm:$0xff]
      %v774 = vld [vmem:[%s2 + $0x3b0] sm:$0xff]
      %v775 = vld [vmem:[%s2 + $0x3b8] sm:$0xff]
      %v776 = vld [vmem:[%s2 + $0x3c0] sm:$0xff]
      %v777 = vld [vmem:[%s2 + $0x3c8] sm:$0xff]
      %v778 = vld [vmem:[%s2 + $0x3d0] sm:$0xff]
      %v779 = vld [vmem:[%s2 + $0x3d8] sm:$0xff]
      %v780 = vld [vmem:[%s2 + $0x3e0] sm:$0xff]
      %v781 = vld [vmem:[%s2 + $0x3e8] sm:$0xff]
      %v782 = vld [vmem:[%s2 + $0x3f0] sm:$0xff]
      %v783 = vld [vmem:[%s2 + $0x3f8] sm:$0xff]
      %v784 = vld [vmem:[%s2 + $0x400] sm:$0xff]
      %v785 = vld [vmem:[%s2 + $0x408] sm:$0xff]
      %v786 = vld [vmem:[%s2 + $0x410] sm:$0xff]
      %v787 = vld [vmem:[%s2 + $0x418] sm:$0xff]
      %v788 = vld [vmem:[%s2 + $0x420] sm:$0xff]
      %v789 = vld [vmem:[%s2 + $0x428] sm:$0xff]
      %v790 = vld [vmem:[%s2 + $0x430] sm:$0xff]
      %v791 = vld [vmem:[%s2 + $0x438] sm:$0xff]
      %v792 = vld [vmem:[%s2 + $0x440] sm:$0xff]
      %v793 = vld [vmem:[%s2 + $0x448] sm:$0xff]
      %v794 = vld [vmem:[%s2 + $0x450] sm:$0xff]
      %v795 = vld [vmem:[%s2 + $0x458] sm:$0xff]
      %v796 = vld [vmem:[%s2 + $0x460] sm:$0xff]
      %v797 = vld [vmem:[%s2 + $0x468] sm:$0xff]
      %v798 = vld [vmem:[%s2 + $0x470] sm:$0xff]
      %v799 = vld [vmem:[%s2 + $0x478] sm:$0xff]
      %v800 = vld [vmem:[%s2 + $0x480] sm:$0xff]
      %v801 = vld [vmem:[%s2 + $0x488] sm:$0xff]
      %v802 = vld [vmem:[%s2 + $0x490] sm:$0xff]
      %v803 = vld [vmem:[%s2 + $0x498] sm:$0xff]
      %v804 = vld [vmem:[%s2 + $0x4a0] sm:$0xff]
      %v805 = vld [vmem:[%s2 + $0x4a8] sm:$0xff]
      %v806 = vld [vmem:[%s2 + $0x4b0] sm:$0xff]
      %v807 = vld [vmem:[%s2 + $0x4b8] sm:$0xff]
      %v808 = vld [vmem:[%s2 + $0x4c0] sm:$0xff]
      %v809 = vld [vmem:[%s2 + $0x4c8] sm:$0xff]
      %v810 = vld [vmem:[%s2 + $0x4d0] sm:$0xff]
      %v811 = vld [vmem:[%s2 + $0x4d8] sm:$0xff]
      %v812 = vld [vmem:[%s2 + $0x4e0] sm:$0xff]
      %v813 = vld [vmem:[%s2 + $0x4e8] sm:$0xff]
      %v814 = vld [vmem:[%s2 + $0x4f0] sm:$0xff]
      %v815 = vld [vmem:[%s2 + $0x4f8] sm:$0xff]
      %v816 = vld [vmem:[%s2 + $0x500] sm:$0xff]
      %v817 = vld [vmem:[%s2 + $0x508] sm:$0xff]
      %v818 = vld [vmem:[%s2 + $0x510] sm:$0xff]
      %v819 = vld [vmem:[%s2 + $0x518] sm:$0xff]
      %v820 = vld [vmem:[%s2 + $0x520] sm:$0xff]
      %v821 = vld [vmem:[%s2 + $0x528] sm:$0xff]
      %v822 = vld [vmem:[%s2 + $0x530] sm:$0xff]
      %v823 = vld [vmem:[%s2 + $0x538] sm:$0xff]
      %v824 = vld [vmem:[%s2 + $0x540] sm:$0xff]
      %v825 = vld [vmem:[%s2 + $0x548] sm:$0xff]
      %v826 = vld [vmem:[%s2 + $0x550] sm:$0xff]
      %v827 = vld [vmem:[%s2 + $0x558] sm:$0xff]
      %v828 = vld [vmem:[%s2 + $0x560] sm:$0xff]
      %v829 = vld [vmem:[%s2 + $0x568] sm:$0xff]
      %v830 = vld [vmem:[%s2 + $0x570] sm:$0xff]
      %v831 = vld [vmem:[%s2 + $0x578] sm:$0xff]
      %v832 = vld [vmem:[%s2 + $0x580] sm:$0xff]
      %v833 = vld [vmem:[%s2 + $0x588] sm:$0xff]
      %v834 = vld [vmem:[%s2 + $0x590] sm:$0xff]
      %v835 = vld [vmem:[%s2 + $0x598] sm:$0xff]
      %v836 = vld [vmem:[%s2 + $0x5a0] sm:$0xff]
      %v837 = vld [vmem:[%s2 + $0x5a8] sm:$0xff]
      %v838 = vld [vmem:[%s2 + $0x5b0] sm:$0xff]
      %v839 = vld [vmem:[%s2 + $0x5b8] sm:$0xff]
      %v840 = vld [vmem:[%s2 + $0x5c0] sm:$0xff]
      %v841 = vld [vmem:[%s2 + $0x5c8] sm:$0xff]
      %v842 = vld [vmem:[%s2 + $0x5d0] sm:$0xff]
      %v843 = vld [vmem:[%s2 + $0x5d8] sm:$0xff]
      %v844 = vld [vmem:[%s2 + $0x5e0] sm:$0xff]
      %v845 = vld [vmem:[%s2 + $0x5e8] sm:$0xff]
      %v846 = vld [vmem:[%s2 + $0x5f0] sm:$0xff]
      %v847 = vld [vmem:[%s2 + $0x5f8] sm:$0xff]
      %v848 = vld [vmem:[%s4] sm:$0x3f]
      %v850 = vlaneseq
      %v851 = vshrl.u32 %v850, 7
      %v852 = vsub.s32 0, %v851
      %v853 = vrot.slane %v848, %v852
      %v854 = vlaneseq
      %v855 = vshrl.u32 %v854, 7
      %v856 = vsub.s32 1, %v855
      %v857 = vrot.slane %v848, %v856
      %v858 = vlaneseq
      %v859 = vshrl.u32 %v858, 7
      %v860 = vsub.s32 2, %v859
      %v861 = vrot.slane %v848, %v860
      %v862 = vlaneseq
      %v863 = vshrl.u32 %v862, 7
      %v864 = vsub.s32 3, %v863
      %v865 = vrot.slane %v848, %v864
      %v866 = vlaneseq
      %v867 = vshrl.u32 %v866, 7
      %v868 = vsub.s32 4, %v867
      %v869 = vrot.slane %v848, %v868
      %v870 = vlaneseq
      %v871 = vshrl.u32 %v870, 7
      %v872 = vsub.s32 5, %v871
      %v873 = vrot.slane %v848, %v872
      %v880 = vld [vmem:[#allocation3] sm:$0xff]
      %v881 = vld [vmem:[#allocation3 + $0x8] sm:$0xff]
      %s882 = smul.u32 0, 6
      %s883 = smul.addr %s882, 8
      %s884 = scalar_lea.vmem [#allocation2], %s883
      %v885 = vld [vmem:[%s884] sm:$0xff]
      %v886 = vld [vmem:[%s884 + $0x8] sm:$0xff]
      %v887 = vld [vmem:[%s884 + $0x10] sm:$0xff]
      %v888 = vld [vmem:[%s884 + $0x18] sm:$0xff]
      %v889 = vld [vmem:[%s884 + $0x20] sm:$0xff]
      %v890 = vld [vmem:[%s884 + $0x28] sm:$0xff]
      %891 = vmatprep.subr.mxu0 %v747
      %892 = vmatpush1.msra.mxu0 %v746
      %893 = vmatprep.subr.mxu0 %v741
      %894 = vmatpush1.msra.mxu0 %v740
      %895 = vmatprep.subr.mxu0 %v735
      %896 = vmatpush1.msra.mxu0 %v734
      %897 = vmatprep.subr.mxu0 %v729
      %898 = vmatpush1.msra.mxu0 %v728
      %899 = vmatprep.subr.mxu0 %v723
      %900 = vmatpush1.msra.mxu0 %v722
      %901 = vmatprep.subr.mxu0 %v717
      %902 = vmatpush1.msra.mxu0 %v716
      %903 = vmatprep.subr.mxu0 %v711
      %904 = vmatpush1.msra.mxu0 %v710
      %905 = vmatprep.subr.mxu0 %v705
      %906 = vmatpush1.msra.mxu0 %v704
      %907 = vmatprep.subr.mxu0 %v699
      %908 = vmatpush1.msra.mxu0 %v698
      %909 = vmatprep.subr.mxu0 %v693
      %910 = vmatpush1.msra.mxu0 %v692
      %911 = vmatprep.subr.mxu0 %v687
      %912 = vmatpush1.msra.mxu0 %v686
      %913 = vmatprep.subr.mxu0 %v681
      %914 = vmatpush1.msra.mxu0 %v680
      %915 = vmatprep.subr.mxu0 %v675
      %916 = vmatpush1.msra.mxu0 %v674
      %917 = vmatprep.subr.mxu0 %v669
      %918 = vmatpush1.msra.mxu0 %v668
      %919 = vmatprep.subr.mxu0 %v663
      %920 = vmatpush1.msra.mxu0 %v662
      %921 = vmatprep.subr.mxu0 %v657
      %922 = vmatpush1.msra.mxu0 %v656
      %923 = vmatprep.subr.mxu0 %v843
      %924 = vmatpush2.msra.mxu0 %v842
      %925 = vmatprep.subr.mxu0 %v837
      %926 = vmatpush2.msra.mxu0 %v836
      %927 = vmatprep.subr.mxu0 %v831
      %928 = vmatpush2.msra.mxu0 %v830
      %929 = vmatprep.subr.mxu0 %v825
      %930 = vmatpush2.msra.mxu0 %v824
      %931 = vmatprep.subr.mxu0 %v819
      %932 = vmatpush2.msra.mxu0 %v818
      %933 = vmatprep.subr.mxu0 %v813
      %934 = vmatpush2.msra.mxu0 %v812
      %935 = vmatprep.subr.mxu0 %v807
      %936 = vmatpush2.msra.mxu0 %v806
      %937 = vmatprep.subr.mxu0 %v801
      %938 = vmatpush2.msra.mxu0 %v800
      %939 = vmatprep.subr.mxu0 %v795
      %940 = vmatpush2.msra.mxu0 %v794
      %941 = vmatprep.subr.mxu0 %v789
      %942 = vmatpush2.msra.mxu0 %v788
      %943 = vmatprep.subr.mxu0 %v783
      %944 = vmatpush2.msra.mxu0 %v782
      %945 = vmatprep.subr.mxu0 %v777
      %946 = vmatpush2.msra.mxu0 %v776
      %947 = vmatprep.subr.mxu0 %v771
      %948 = vmatpush2.msra.mxu0 %v770
      %949 = vmatprep.subr.mxu0 %v765
      %950 = vmatpush2.msra.mxu0 %v764
      %951 = vmatprep.subr.mxu0 %v759
      %952 = vmatpush2.msra.mxu0 %v758
      %953 = vmatprep.subr.mxu0 %v753
      %954 = vmatpush2.msra.mxu0 %v752
      %955 = vmatprep.mubr.f32.mxu0 %v881
      %956 = vmatmul.mubr.f32.gmra.mxu0 %v880
      %v957 = vpop.f32.mrf.mxu0
      %v958 = vadd.f32 %v853, %v957
      %v959 = vpop.f32.mrf.mxu0
      %v960 = vadd.f32 %v857, %v959
      %961 = vdwg.mxu0
      %962 = vmatprep.subr.mxu0 %v749
      %963 = vmatpush1.msra.mxu0 %v748
      %964 = vmatprep.subr.mxu0 %v743
      %965 = vmatpush1.msra.mxu0 %v742
      %966 = vmatprep.subr.mxu0 %v737
      %967 = vmatpush1.msra.mxu0 %v736
      %968 = vmatprep.subr.mxu0 %v731
      %969 = vmatpush1.msra.mxu0 %v730
      %970 = vmatprep.subr.mxu0 %v725
      %971 = vmatpush1.msra.mxu0 %v724
      %972 = vmatprep.subr.mxu0 %v719
      %973 = vmatpush1.msra.mxu0 %v718
      %974 = vmatprep.subr.mxu0 %v713
      %975 = vmatpush1.msra.mxu0 %v712
      %976 = vmatprep.subr.mxu0 %v707
      %977 = vmatpush1.msra.mxu0 %v706
      %978 = vmatprep.subr.mxu0 %v701
      %979 = vmatpush1.msra.mxu0 %v700
      %980 = vmatprep.subr.mxu0 %v695
      %981 = vmatpush1.msra.mxu0 %v694
      %982 = vmatprep.subr.mxu0 %v689
      %983 = vmatpush1.msra.mxu0 %v688
      %984 = vmatprep.subr.mxu0 %v683
      %985 = vmatpush1.msra.mxu0 %v682
      %986 = vmatprep.subr.mxu0 %v677
      %987 = vmatpush1.msra.mxu0 %v676
      %988 = vmatprep.subr.mxu0 %v671
      %989 = vmatpush1.msra.mxu0 %v670
      %990 = vmatprep.subr.mxu0 %v665
      %991 = vmatpush1.msra.mxu0 %v664
      %992 = vmatprep.subr.mxu0 %v659
      %993 = vmatpush1.msra.mxu0 %v658
      %994 = vmatprep.subr.mxu0 %v845
      %995 = vmatpush2.msra.mxu0 %v844
      %996 = vmatprep.subr.mxu0 %v839
      %997 = vmatpush2.msra.mxu0 %v838
      %998 = vmatprep.subr.mxu0 %v833
      %999 = vmatpush2.msra.mxu0 %v832
      %1000 = vmatprep.subr.mxu0 %v827
      %1001 = vmatpush2.msra.mxu0 %v826
      %1002 = vmatprep.subr.mxu0 %v821
      %1003 = vmatpush2.msra.mxu0 %v820
      %1004 = vmatprep.subr.mxu0 %v815
      %1005 = vmatpush2.msra.mxu0 %v814
      %1006 = vmatprep.subr.mxu0 %v809
      %1007 = vmatpush2.msra.mxu0 %v808
      %1008 = vmatprep.subr.mxu0 %v803
      %1009 = vmatpush2.msra.mxu0 %v802
      %1010 = vmatprep.subr.mxu0 %v797
      %1011 = vmatpush2.msra.mxu0 %v796
      %1012 = vmatprep.subr.mxu0 %v791
      %1013 = vmatpush2.msra.mxu0 %v790
      %1014 = vmatprep.subr.mxu0 %v785
      %1015 = vmatpush2.msra.mxu0 %v784
      %1016 = vmatprep.subr.mxu0 %v779
      %1017 = vmatpush2.msra.mxu0 %v778
      %1018 = vmatprep.subr.mxu0 %v773
      %1019 = vmatpush2.msra.mxu0 %v772
      %1020 = vmatprep.subr.mxu0 %v767
      %1021 = vmatpush2.msra.mxu0 %v766
      %1022 = vmatprep.subr.mxu0 %v761
      %1023 = vmatpush2.msra.mxu0 %v760
      %1024 = vmatprep.subr.mxu0 %v755
      %1025 = vmatpush2.msra.mxu0 %v754
      %1026 = vmatprep.mubr.f32.mxu0 %v881
      %1027 = vmatmul.mubr.f32.gmra.mxu0 %v880
      %v1028 = vpop.f32.mrf.mxu0
      %v1029 = vadd.f32 %v861, %v1028
      %v1030 = vpop.f32.mrf.mxu0
      %v1031 = vadd.f32 %v865, %v1030
      %1032 = vdwg.mxu0
      %1033 = vmatprep.subr.mxu0 %v751
      %1034 = vmatpush1.msra.mxu0 %v750
      %1035 = vmatprep.subr.mxu0 %v745
      %1036 = vmatpush1.msra.mxu0 %v744
      %1037 = vmatprep.subr.mxu0 %v739
      %1038 = vmatpush1.msra.mxu0 %v738
      %1039 = vmatprep.subr.mxu0 %v733
      %1040 = vmatpush1.msra.mxu0 %v732
      %1041 = vmatprep.subr.mxu0 %v727
      %1042 = vmatpush1.msra.mxu0 %v726
      %1043 = vmatprep.subr.mxu0 %v721
      %1044 = vmatpush1.msra.mxu0 %v720
      %1045 = vmatprep.subr.mxu0 %v715
      %1046 = vmatpush1.msra.mxu0 %v714
      %1047 = vmatprep.subr.mxu0 %v709
      %1048 = vmatpush1.msra.mxu0 %v708
      %1049 = vmatprep.subr.mxu0 %v703
      %1050 = vmatpush1.msra.mxu0 %v702
      %1051 = vmatprep.subr.mxu0 %v697
      %1052 = vmatpush1.msra.mxu0 %v696
      %1053 = vmatprep.subr.mxu0 %v691
      %1054 = vmatpush1.msra.mxu0 %v690
      %1055 = vmatprep.subr.mxu0 %v685
      %1056 = vmatpush1.msra.mxu0 %v684
      %1057 = vmatprep.subr.mxu0 %v679
      %1058 = vmatpush1.msra.mxu0 %v678
      %1059 = vmatprep.subr.mxu0 %v673
      %1060 = vmatpush1.msra.mxu0 %v672
      %1061 = vmatprep.subr.mxu0 %v667
      %1062 = vmatpush1.msra.mxu0 %v666
      %1063 = vmatprep.subr.mxu0 %v661
      %1064 = vmatpush1.msra.mxu0 %v660
      %1065 = vmatprep.subr.mxu0 %v847
      %1066 = vmatpush2.msra.mxu0 %v846
      %1067 = vmatprep.subr.mxu0 %v841
      %1068 = vmatpush2.msra.mxu0 %v840
      %1069 = vmatprep.subr.mxu0 %v835
      %1070 = vmatpush2.msra.mxu0 %v834
      %1071 = vmatprep.subr.mxu0 %v829
      %1072 = vmatpush2.msra.mxu0 %v828
      %1073 = vmatprep.subr.mxu0 %v823
      %1074 = vmatpush2.msra.mxu0 %v822
      %1075 = vmatprep.subr.mxu0 %v817
      %1076 = vmatpush2.msra.mxu0 %v816
      %1077 = vmatprep.subr.mxu0 %v811
      %1078 = vmatpush2.msra.mxu0 %v810
      %1079 = vmatprep.subr.mxu0 %v805
      %1080 = vmatpush2.msra.mxu0 %v804
      %1081 = vmatprep.subr.mxu0 %v799
      %1082 = vmatpush2.msra.mxu0 %v798
      %1083 = vmatprep.subr.mxu0 %v793
      %1084 = vmatpush2.msra.mxu0 %v792
      %1085 = vmatprep.subr.mxu0 %v787
      %1086 = vmatpush2.msra.mxu0 %v786
      %1087 = vmatprep.subr.mxu0 %v781
      %1088 = vmatpush2.msra.mxu0 %v780
      %1089 = vmatprep.subr.mxu0 %v775
      %1090 = vmatpush2.msra.mxu0 %v774
      %1091 = vmatprep.subr.mxu0 %v769
      %1092 = vmatpush2.msra.mxu0 %v768
      %1093 = vmatprep.subr.mxu0 %v763
      %1094 = vmatpush2.msra.mxu0 %v762
      %1095 = vmatprep.subr.mxu0 %v757
      %1096 = vmatpush2.msra.mxu0 %v756
      %1097 = vmatprep.mubr.f32.mxu0 %v881
      %1098 = vmatmul.mubr.f32.gmra.mxu0 %v880
      %v1099 = vpop.f32.mrf.mxu0
      %v1100 = vadd.f32 %v869, %v1099
      %v1101 = vpop.f32.mrf.mxu0
      %v1102 = vadd.f32 %v873, %v1101
      %1103 = vdwg.mxu0
      %v1104 = vadd.f32 %v885, %v958
      %v1105 = vadd.f32 %v886, %v960
      %v1106 = vxor.u32 %v1104, 2147483648
      %v1107 = vxor.u32 %v1105, 2147483648
      %v1108 = vmul.f32 %v1106, 1.442695
      %v1109 = vpow.pop %v1108
      %v1110 = vmul.f32 %v1107, 1.442695
      %v1111 = vpow.pop %v1110
      %v1112 = vadd.f32 %v1109, 1.0
      %v1113 = vadd.f32 %v1111, 1.0
      %v1114 = vrcp.pop %v1112
      %v1115 = vmul.f32 1.0, %v1114
      %v1116 = vrcp.pop %v1113
      %v1117 = vmul.f32 1.0, %v1116
      %v1118 = vadd.f32 %v887, %v1029
      %v1119 = vadd.f32 %v888, %v1031
      %v1120 = vxor.u32 %v1118, 2147483648
      %v1121 = vxor.u32 %v1119, 2147483648
      %v1122 = vmul.f32 %v1120, 1.442695
      %v1123 = vpow.pop %v1122
      %v1124 = vmul.f32 %v1121, 1.442695
      %v1125 = vpow.pop %v1124
      %v1126 = vadd.f32 %v1123, 1.0
      %v1127 = vadd.f32 %v1125, 1.0
      %v1128 = vrcp.pop %v1126
      %v1129 = vmul.f32 1.0, %v1128
      %v1130 = vrcp.pop %v1127
      %v1131 = vmul.f32 1.0, %v1130
      %v1132 = vmul.f32 %v1115, %v1100
      %v1133 = vmul.f32 %v1117, %v1102
      %v1134 = vadd.f32 %v889, %v1132
      %v1135 = vadd.f32 %v890, %v1133
      %v1136 = vtanh.pop %v1134
      %v1137 = vtanh.pop %v1135
      %v1138 = vsub.f32 1.0, %v1129
      %v1139 = vsub.f32 1.0, %v1131
      %v1140 = vmul.f32 %v1138, %v1136
      %v1141 = vmul.f32 %v1139, %v1137
      %v1142 = vmul.f32 %v1129, %v880
      %v1143 = vmul.f32 %v1131, %v881
      %v1144 = vadd.f32 %v1140, %v1142
      %v1145 = vadd.f32 %v1141, %v1143
      %1146 = vst [vmem:[%s288] sm:$0xff] %v1144
      %s1147 = scalar_lea.vmem %s295, 24
      %1148 = vst [vmem:[%s1147] sm:$0xff] %v1145
      %s1149 = smul.u32 1, 6
      %s1150 = smul.addr %s1149, 8
      %s1151 = scalar_lea.vmem [#allocation2], %s1150
      %v1152 = vld [vmem:[%s1151] sm:$0xff]
      %v1153 = vld [vmem:[%s1151 + $0x8] sm:$0xff]
      %v1154 = vld [vmem:[%s1151 + $0x10] sm:$0xff]
      %v1155 = vld [vmem:[%s1151 + $0x18] sm:$0xff]
      %v1156 = vld [vmem:[%s1151 + $0x20] sm:$0xff]
      %v1157 = vld [vmem:[%s1151 + $0x28] sm:$0xff]
      %1158 = vmatprep.subr.mxu0 %v747
      %1159 = vmatpush1.msra.mxu0 %v746
      %1160 = vmatprep.subr.mxu0 %v741
      %1161 = vmatpush1.msra.mxu0 %v740
      %1162 = vmatprep.subr.mxu0 %v735
      %1163 = vmatpush1.msra.mxu0 %v734
      %1164 = vmatprep.subr.mxu0 %v729
      %1165 = vmatpush1.msra.mxu0 %v728
      %1166 = vmatprep.subr.mxu0 %v723
      %1167 = vmatpush1.msra.mxu0 %v722
      %1168 = vmatprep.subr.mxu0 %v717
      %1169 = vmatpush1.msra.mxu0 %v716
      %1170 = vmatprep.subr.mxu0 %v711
      %1171 = vmatpush1.msra.mxu0 %v710
      %1172 = vmatprep.subr.mxu0 %v705
      %1173 = vmatpush1.msra.mxu0 %v704
      %1174 = vmatprep.subr.mxu0 %v699
      %1175 = vmatpush1.msra.mxu0 %v698
      %1176 = vmatprep.subr.mxu0 %v693
      %1177 = vmatpush1.msra.mxu0 %v692
      %1178 = vmatprep.subr.mxu0 %v687
      %1179 = vmatpush1.msra.mxu0 %v686
      %1180 = vmatprep.subr.mxu0 %v681
      %1181 = vmatpush1.msra.mxu0 %v680
      %1182 = vmatprep.subr.mxu0 %v675
      %1183 = vmatpush1.msra.mxu0 %v674
      %1184 = vmatprep.subr.mxu0 %v669
      %1185 = vmatpush1.msra.mxu0 %v668
      %1186 = vmatprep.subr.mxu0 %v663
      %1187 = vmatpush1.msra.mxu0 %v662
      %1188 = vmatprep.subr.mxu0 %v657
      %1189 = vmatpush1.msra.mxu0 %v656
      %1190 = vmatprep.subr.mxu0 %v843
      %1191 = vmatpush2.msra.mxu0 %v842
      %1192 = vmatprep.subr.mxu0 %v837
      %1193 = vmatpush2.msra.mxu0 %v836
      %1194 = vmatprep.subr.mxu0 %v831
      %1195 = vmatpush2.msra.mxu0 %v830
      %1196 = vmatprep.subr.mxu0 %v825
      %1197 = vmatpush2.msra.mxu0 %v824
      %1198 = vmatprep.subr.mxu0 %v819
      %1199 = vmatpush2.msra.mxu0 %v818
      %1200 = vmatprep.subr.mxu0 %v813
      %1201 = vmatpush2.msra.mxu0 %v812
      %1202 = vmatprep.subr.mxu0 %v807
      %1203 = vmatpush2.msra.mxu0 %v806
      %1204 = vmatprep.subr.mxu0 %v801
      %1205 = vmatpush2.msra.mxu0 %v800
      %1206 = vmatprep.subr.mxu0 %v795
      %1207 = vmatpush2.msra.mxu0 %v794
      %1208 = vmatprep.subr.mxu0 %v789
      %1209 = vmatpush2.msra.mxu0 %v788
      %1210 = vmatprep.subr.mxu0 %v783
      %1211 = vmatpush2.msra.mxu0 %v782
      %1212 = vmatprep.subr.mxu0 %v777
      %1213 = vmatpush2.msra.mxu0 %v776
      %1214 = vmatprep.subr.mxu0 %v771
      %1215 = vmatpush2.msra.mxu0 %v770
      %1216 = vmatprep.subr.mxu0 %v765
      %1217 = vmatpush2.msra.mxu0 %v764
      %1218 = vmatprep.subr.mxu0 %v759
      %1219 = vmatpush2.msra.mxu0 %v758
      %1220 = vmatprep.subr.mxu0 %v753
      %1221 = vmatpush2.msra.mxu0 %v752
      %1222 = vmatprep.mubr.f32.mxu0 %v1145
      %1223 = vmatmul.mubr.f32.gmra.mxu0 %v1144
      %v1224 = vpop.f32.mrf.mxu0
      %v1225 = vadd.f32 %v853, %v1224
      %v1226 = vpop.f32.mrf.mxu0
      %v1227 = vadd.f32 %v857, %v1226
      %1228 = vdwg.mxu0
      %1229 = vmatprep.subr.mxu0 %v749
      %1230 = vmatpush1.msra.mxu0 %v748
      %1231 = vmatprep.subr.mxu0 %v743
      %1232 = vmatpush1.msra.mxu0 %v742
      %1233 = vmatprep.subr.mxu0 %v737
      %1234 = vmatpush1.msra.mxu0 %v736
      %1235 = vmatprep.subr.mxu0 %v731
      %1236 = vmatpush1.msra.mxu0 %v730
      %1237 = vmatprep.subr.mxu0 %v725
      %1238 = vmatpush1.msra.mxu0 %v724
      %1239 = vmatprep.subr.mxu0 %v719
      %1240 = vmatpush1.msra.mxu0 %v718
      %1241 = vmatprep.subr.mxu0 %v713
      %1242 = vmatpush1.msra.mxu0 %v712
      %1243 = vmatprep.subr.mxu0 %v707
      %1244 = vmatpush1.msra.mxu0 %v706
      %1245 = vmatprep.subr.mxu0 %v701
      %1246 = vmatpush1.msra.mxu0 %v700
      %1247 = vmatprep.subr.mxu0 %v695
      %1248 = vmatpush1.msra.mxu0 %v694
      %1249 = vmatprep.subr.mxu0 %v689
      %1250 = vmatpush1.msra.mxu0 %v688
      %1251 = vmatprep.subr.mxu0 %v683
      %1252 = vmatpush1.msra.mxu0 %v682
      %1253 = vmatprep.subr.mxu0 %v677
      %1254 = vmatpush1.msra.mxu0 %v676
      %1255 = vmatprep.subr.mxu0 %v671
      %1256 = vmatpush1.msra.mxu0 %v670
      %1257 = vmatprep.subr.mxu0 %v665
      %1258 = vmatpush1.msra.mxu0 %v664
      %1259 = vmatprep.subr.mxu0 %v659
      %1260 = vmatpush1.msra.mxu0 %v658
      %1261 = vmatprep.subr.mxu0 %v845
      %1262 = vmatpush2.msra.mxu0 %v844
      %1263 = vmatprep.subr.mxu0 %v839
      %1264 = vmatpush2.msra.mxu0 %v838
      %1265 = vmatprep.subr.mxu0 %v833
      %1266 = vmatpush2.msra.mxu0 %v832
      %1267 = vmatprep.subr.mxu0 %v827
      %1268 = vmatpush2.msra.mxu0 %v826
      %1269 = vmatprep.subr.mxu0 %v821
      %1270 = vmatpush2.msra.mxu0 %v820
      %1271 = vmatprep.subr.mxu0 %v815
      %1272 = vmatpush2.msra.mxu0 %v814
      %1273 = vmatprep.subr.mxu0 %v809
      %1274 = vmatpush2.msra.mxu0 %v808
      %1275 = vmatprep.subr.mxu0 %v803
      %1276 = vmatpush2.msra.mxu0 %v802
      %1277 = vmatprep.subr.mxu0 %v797
      %1278 = vmatpush2.msra.mxu0 %v796
      %1279 = vmatprep.subr.mxu0 %v791
      %1280 = vmatpush2.msra.mxu0 %v790
      %1281 = vmatprep.subr.mxu0 %v785
      %1282 = vmatpush2.msra.mxu0 %v784
      %1283 = vmatprep.subr.mxu0 %v779
      %1284 = vmatpush2.msra.mxu0 %v778
      %1285 = vmatprep.subr.mxu0 %v773
      %1286 = vmatpush2.msra.mxu0 %v772
      %1287 = vmatprep.subr.mxu0 %v767
      %1288 = vmatpush2.msra.mxu0 %v766
      %1289 = vmatprep.subr.mxu0 %v761
      %1290 = vmatpush2.msra.mxu0 %v760
      %1291 = vmatprep.subr.mxu0 %v755
      %1292 = vmatpush2.msra.mxu0 %v754
      %1293 = vmatprep.mubr.f32.mxu0 %v1145
      %1294 = vmatmul.mubr.f32.gmra.mxu0 %v1144
      %v1295 = vpop.f32.mrf.mxu0
      %v1296 = vadd.f32 %v861, %v1295
      %v1297 = vpop.f32.mrf.mxu0
      %v1298 = vadd.f32 %v865, %v1297
      %1299 = vdwg.mxu0
      %1300 = vmatprep.subr.mxu0 %v751
      %1301 = vmatpush1.msra.mxu0 %v750
      %1302 = vmatprep.subr.mxu0 %v745
      %1303 = vmatpush1.msra.mxu0 %v744
      %1304 = vmatprep.subr.mxu0 %v739
      %1305 = vmatpush1.msra.mxu0 %v738
      %1306 = vmatprep.subr.mxu0 %v733
      %1307 = vmatpush1.msra.mxu0 %v732
      %1308 = vmatprep.subr.mxu0 %v727
      %1309 = vmatpush1.msra.mxu0 %v726
      %1310 = vmatprep.subr.mxu0 %v721
      %1311 = vmatpush1.msra.mxu0 %v720
      %1312 = vmatprep.subr.mxu0 %v715
      %1313 = vmatpush1.msra.mxu0 %v714
      %1314 = vmatprep.subr.mxu0 %v709
      %1315 = vmatpush1.msra.mxu0 %v708
      %1316 = vmatprep.subr.mxu0 %v703
      %1317 = vmatpush1.msra.mxu0 %v702
      %1318 = vmatprep.subr.mxu0 %v697
      %1319 = vmatpush1.msra.mxu0 %v696
      %1320 = vmatprep.subr.mxu0 %v691
      %1321 = vmatpush1.msra.mxu0 %v690
      %1322 = vmatprep.subr.mxu0 %v685
      %1323 = vmatpush1.msra.mxu0 %v684
      %1324 = vmatprep.subr.mxu0 %v679
      %1325 = vmatpush1.msra.mxu0 %v678
      %1326 = vmatprep.subr.mxu0 %v673
      %1327 = vmatpush1.msra.mxu0 %v672
      %1328 = vmatprep.subr.mxu0 %v667
      %1329 = vmatpush1.msra.mxu0 %v666
      %1330 = vmatprep.subr.mxu0 %v661
      %1331 = vmatpush1.msra.mxu0 %v660
      %1332 = vmatprep.subr.mxu0 %v847
      %1333 = vmatpush2.msra.mxu0 %v846
      %1334 = vmatprep.subr.mxu0 %v841
      %1335 = vmatpush2.msra.mxu0 %v840
      %1336 = vmatprep.subr.mxu0 %v835
      %1337 = vmatpush2.msra.mxu0 %v834
      %1338 = vmatprep.subr.mxu0 %v829
      %1339 = vmatpush2.msra.mxu0 %v828
      %1340 = vmatprep.subr.mxu0 %v823
      %1341 = vmatpush2.msra.mxu0 %v822
      %1342 = vmatprep.subr.mxu0 %v817
      %1343 = vmatpush2.msra.mxu0 %v816
      %1344 = vmatprep.subr.mxu0 %v811
      %1345 = vmatpush2.msra.mxu0 %v810
      %1346 = vmatprep.subr.mxu0 %v805
      %1347 = vmatpush2.msra.mxu0 %v804
      %1348 = vmatprep.subr.mxu0 %v799
      %1349 = vmatpush2.msra.mxu0 %v798
      %1350 = vmatprep.subr.mxu0 %v793
      %1351 = vmatpush2.msra.mxu0 %v792
      %1352 = vmatprep.subr.mxu0 %v787
      %1353 = vmatpush2.msra.mxu0 %v786
      %1354 = vmatprep.subr.mxu0 %v781
      %1355 = vmatpush2.msra.mxu0 %v780
      %1356 = vmatprep.subr.mxu0 %v775
      %1357 = vmatpush2.msra.mxu0 %v774
      %1358 = vmatprep.subr.mxu0 %v769
      %1359 = vmatpush2.msra.mxu0 %v768
      %1360 = vmatprep.subr.mxu0 %v763
      %1361 = vmatpush2.msra.mxu0 %v762
      %1362 = vmatprep.subr.mxu0 %v757
      %1363 = vmatpush2.msra.mxu0 %v756
      %1364 = vmatprep.mubr.f32.mxu0 %v1145
      %1365 = vmatmul.mubr.f32.gmra.mxu0 %v1144
      %v1366 = vpop.f32.mrf.mxu0
      %v1367 = vadd.f32 %v869, %v1366
      %v1368 = vpop.f32.mrf.mxu0
      %v1369 = vadd.f32 %v873, %v1368
      %1370 = vdwg.mxu0
      %v1371 = vadd.f32 %v1152, %v1225
      %v1372 = vadd.f32 %v1153, %v1227
      %v1373 = vxor.u32 %v1371, 2147483648
      %v1374 = vxor.u32 %v1372, 2147483648
      %v1375 = vmul.f32 %v1373, 1.442695
      %v1376 = vpow.pop %v1375
      %v1377 = vmul.f32 %v1374, 1.442695
      %v1378 = vpow.pop %v1377
      %v1379 = vadd.f32 %v1376, 1.0
      %v1380 = vadd.f32 %v1378, 1.0
      %v1381 = vrcp.pop %v1379
      %v1382 = vmul.f32 1.0, %v1381
      %v1383 = vrcp.pop %v1380
      %v1384 = vmul.f32 1.0, %v1383
      %v1385 = vadd.f32 %v1154, %v1296
      %v1386 = vadd.f32 %v1155, %v1298
      %v1387 = vxor.u32 %v1385, 2147483648
      %v1388 = vxor.u32 %v1386, 2147483648
      %v1389 = vmul.f32 %v1387, 1.442695
      %v1390 = vpow.pop %v1389
      %v1391 = vmul.f32 %v1388, 1.442695
      %v1392 = vpow.pop %v1391
      %v1393 = vadd.f32 %v1390, 1.0
      %v1394 = vadd.f32 %v1392, 1.0
      %v1395 = vrcp.pop %v1393
      %v1396 = vmul.f32 1.0, %v1395
      %v1397 = vrcp.pop %v1394
      %v1398 = vmul.f32 1.0, %v1397
      %v1399 = vmul.f32 %v1382, %v1367
      %v1400 = vmul.f32 %v1384, %v1369
      %v1401 = vadd.f32 %v1156, %v1399
      %v1402 = vadd.f32 %v1157, %v1400
      %v1403 = vtanh.pop %v1401
      %v1404 = vtanh.pop %v1402
      %v1405 = vsub.f32 1.0, %v1396
      %v1406 = vsub.f32 1.0, %v1398
      %v1407 = vmul.f32 %v1405, %v1403
      %v1408 = vmul.f32 %v1406, %v1404
      %v1409 = vmul.f32 %v1396, %v1144
      %v1410 = vmul.f32 %v1398, %v1145
      %v1411 = vadd.f32 %v1407, %v1409
      %v1412 = vadd.f32 %v1408, %v1410
      %s1413 = scalar_lea.vmem %s288, 8
      %1414 = vst [vmem:[%s1413] sm:$0xff] %v1411
      %s1415 = scalar_lea.vmem %s295, 16
      %1416 = vst [vmem:[%s1415] sm:$0xff] %v1412
      %s1417 = smul.u32 2, 6
      %s1418 = smul.addr %s1417, 8
      %s1419 = scalar_lea.vmem [#allocation2], %s1418
      %v1420 = vld [vmem:[%s1419] sm:$0xff]
      %v1421 = vld [vmem:[%s1419 + $0x8] sm:$0xff]
      %v1422 = vld [vmem:[%s1419 + $0x10] sm:$0xff]
      %v1423 = vld [vmem:[%s1419 + $0x18] sm:$0xff]
      %v1424 = vld [vmem:[%s1419 + $0x20] sm:$0xff]
      %v1425 = vld [vmem:[%s1419 + $0x28] sm:$0xff]
      %1426 = vmatprep.subr.mxu0 %v747
      %1427 = vmatpush1.msra.mxu0 %v746
      %1428 = vmatprep.subr.mxu0 %v741
      %1429 = vmatpush1.msra.mxu0 %v740
      %1430 = vmatprep.subr.mxu0 %v735
      %1431 = vmatpush1.msra.mxu0 %v734
      %1432 = vmatprep.subr.mxu0 %v729
      %1433 = vmatpush1.msra.mxu0 %v728
      %1434 = vmatprep.subr.mxu0 %v723
      %1435 = vmatpush1.msra.mxu0 %v722
      %1436 = vmatprep.subr.mxu0 %v717
      %1437 = vmatpush1.msra.mxu0 %v716
      %1438 = vmatprep.subr.mxu0 %v711
      %1439 = vmatpush1.msra.mxu0 %v710
      %1440 = vmatprep.subr.mxu0 %v705
      %1441 = vmatpush1.msra.mxu0 %v704
      %1442 = vmatprep.subr.mxu0 %v699
      %1443 = vmatpush1.msra.mxu0 %v698
      %1444 = vmatprep.subr.mxu0 %v693
      %1445 = vmatpush1.msra.mxu0 %v692
      %1446 = vmatprep.subr.mxu0 %v687
      %1447 = vmatpush1.msra.mxu0 %v686
      %1448 = vmatprep.subr.mxu0 %v681
      %1449 = vmatpush1.msra.mxu0 %v680
      %1450 = vmatprep.subr.mxu0 %v675
      %1451 = vmatpush1.msra.mxu0 %v674
      %1452 = vmatprep.subr.mxu0 %v669
      %1453 = vmatpush1.msra.mxu0 %v668
      %1454 = vmatprep.subr.mxu0 %v663
      %1455 = vmatpush1.msra.mxu0 %v662
      %1456 = vmatprep.subr.mxu0 %v657
      %1457 = vmatpush1.msra.mxu0 %v656
      %1458 = vmatprep.subr.mxu0 %v843
      %1459 = vmatpush2.msra.mxu0 %v842
      %1460 = vmatprep.subr.mxu0 %v837
      %1461 = vmatpush2.msra.mxu0 %v836
      %1462 = vmatprep.subr.mxu0 %v831
      %1463 = vmatpush2.msra.mxu0 %v830
      %1464 = vmatprep.subr.mxu0 %v825
      %1465 = vmatpush2.msra.mxu0 %v824
      %1466 = vmatprep.subr.mxu0 %v819
      %1467 = vmatpush2.msra.mxu0 %v818
      %1468 = vmatprep.subr.mxu0 %v813
      %1469 = vmatpush2.msra.mxu0 %v812
      %1470 = vmatprep.subr.mxu0 %v807
      %1471 = vmatpush2.msra.mxu0 %v806
      %1472 = vmatprep.subr.mxu0 %v801
      %1473 = vmatpush2.msra.mxu0 %v800
      %1474 = vmatprep.subr.mxu0 %v795
      %1475 = vmatpush2.msra.mxu0 %v794
      %1476 = vmatprep.subr.mxu0 %v789
      %1477 = vmatpush2.msra.mxu0 %v788
      %1478 = vmatprep.subr.mxu0 %v783
      %1479 = vmatpush2.msra.mxu0 %v782
      %1480 = vmatprep.subr.mxu0 %v777
      %1481 = vmatpush2.msra.mxu0 %v776
      %1482 = vmatprep.subr.mxu0 %v771
      %1483 = vmatpush2.msra.mxu0 %v770
      %1484 = vmatprep.subr.mxu0 %v765
      %1485 = vmatpush2.msra.mxu0 %v764
      %1486 = vmatprep.subr.mxu0 %v759
      %1487 = vmatpush2.msra.mxu0 %v758
      %1488 = vmatprep.subr.mxu0 %v753
      %1489 = vmatpush2.msra.mxu0 %v752
      %1490 = vmatprep.mubr.f32.mxu0 %v1412
      %1491 = vmatmul.mubr.f32.gmra.mxu0 %v1411
      %v1492 = vpop.f32.mrf.mxu0
      %v1493 = vadd.f32 %v853, %v1492
      %v1494 = vpop.f32.mrf.mxu0
      %v1495 = vadd.f32 %v857, %v1494
      %1496 = vdwg.mxu0
      %1497 = vmatprep.subr.mxu0 %v749
      %1498 = vmatpush1.msra.mxu0 %v748
      %1499 = vmatprep.subr.mxu0 %v743
      %1500 = vmatpush1.msra.mxu0 %v742
      %1501 = vmatprep.subr.mxu0 %v737
      %1502 = vmatpush1.msra.mxu0 %v736
      %1503 = vmatprep.subr.mxu0 %v731
      %1504 = vmatpush1.msra.mxu0 %v730
      %1505 = vmatprep.subr.mxu0 %v725
      %1506 = vmatpush1.msra.mxu0 %v724
      %1507 = vmatprep.subr.mxu0 %v719
      %1508 = vmatpush1.msra.mxu0 %v718
      %1509 = vmatprep.subr.mxu0 %v713
      %1510 = vmatpush1.msra.mxu0 %v712
      %1511 = vmatprep.subr.mxu0 %v707
      %1512 = vmatpush1.msra.mxu0 %v706
      %1513 = vmatprep.subr.mxu0 %v701
      %1514 = vmatpush1.msra.mxu0 %v700
      %1515 = vmatprep.subr.mxu0 %v695
      %1516 = vmatpush1.msra.mxu0 %v694
      %1517 = vmatprep.subr.mxu0 %v689
      %1518 = vmatpush1.msra.mxu0 %v688
      %1519 = vmatprep.subr.mxu0 %v683
      %1520 = vmatpush1.msra.mxu0 %v682
      %1521 = vmatprep.subr.mxu0 %v677
      %1522 = vmatpush1.msra.mxu0 %v676
      %1523 = vmatprep.subr.mxu0 %v671
      %1524 = vmatpush1.msra.mxu0 %v670
      %1525 = vmatprep.subr.mxu0 %v665
      %1526 = vmatpush1.msra.mxu0 %v664
      %1527 = vmatprep.subr.mxu0 %v659
      %1528 = vmatpush1.msra.mxu0 %v658
      %1529 = vmatprep.subr.mxu0 %v845
      %1530 = vmatpush2.msra.mxu0 %v844
      %1531 = vmatprep.subr.mxu0 %v839
      %1532 = vmatpush2.msra.mxu0 %v838
      %1533 = vmatprep.subr.mxu0 %v833
      %1534 = vmatpush2.msra.mxu0 %v832
      %1535 = vmatprep.subr.mxu0 %v827
      %1536 = vmatpush2.msra.mxu0 %v826
      %1537 = vmatprep.subr.mxu0 %v821
      %1538 = vmatpush2.msra.mxu0 %v820
      %1539 = vmatprep.subr.mxu0 %v815
      %1540 = vmatpush2.msra.mxu0 %v814
      %1541 = vmatprep.subr.mxu0 %v809
      %1542 = vmatpush2.msra.mxu0 %v808
      %1543 = vmatprep.subr.mxu0 %v803
      %1544 = vmatpush2.msra.mxu0 %v802
      %1545 = vmatprep.subr.mxu0 %v797
      %1546 = vmatpush2.msra.mxu0 %v796
      %1547 = vmatprep.subr.mxu0 %v791
      %1548 = vmatpush2.msra.mxu0 %v790
      %1549 = vmatprep.subr.mxu0 %v785
      %1550 = vmatpush2.msra.mxu0 %v784
      %1551 = vmatprep.subr.mxu0 %v779
      %1552 = vmatpush2.msra.mxu0 %v778
      %1553 = vmatprep.subr.mxu0 %v773
      %1554 = vmatpush2.msra.mxu0 %v772
      %1555 = vmatprep.subr.mxu0 %v767
      %1556 = vmatpush2.msra.mxu0 %v766
      %1557 = vmatprep.subr.mxu0 %v761
      %1558 = vmatpush2.msra.mxu0 %v760
      %1559 = vmatprep.subr.mxu0 %v755
      %1560 = vmatpush2.msra.mxu0 %v754
      %1561 = vmatprep.mubr.f32.mxu0 %v1412
      %1562 = vmatmul.mubr.f32.gmra.mxu0 %v1411
      %v1563 = vpop.f32.mrf.mxu0
      %v1564 = vadd.f32 %v861, %v1563
      %v1565 = vpop.f32.mrf.mxu0
      %v1566 = vadd.f32 %v865, %v1565
      %1567 = vdwg.mxu0
      %1568 = vmatprep.subr.mxu0 %v751
      %1569 = vmatpush1.msra.mxu0 %v750
      %1570 = vmatprep.subr.mxu0 %v745
      %1571 = vmatpush1.msra.mxu0 %v744
      %1572 = vmatprep.subr.mxu0 %v739
      %1573 = vmatpush1.msra.mxu0 %v738
      %1574 = vmatprep.subr.mxu0 %v733
      %1575 = vmatpush1.msra.mxu0 %v732
      %1576 = vmatprep.subr.mxu0 %v727
      %1577 = vmatpush1.msra.mxu0 %v726
      %1578 = vmatprep.subr.mxu0 %v721
      %1579 = vmatpush1.msra.mxu0 %v720
      %1580 = vmatprep.subr.mxu0 %v715
      %1581 = vmatpush1.msra.mxu0 %v714
      %1582 = vmatprep.subr.mxu0 %v709
      %1583 = vmatpush1.msra.mxu0 %v708
      %1584 = vmatprep.subr.mxu0 %v703
      %1585 = vmatpush1.msra.mxu0 %v702
      %1586 = vmatprep.subr.mxu0 %v697
      %1587 = vmatpush1.msra.mxu0 %v696
      %1588 = vmatprep.subr.mxu0 %v691
      %1589 = vmatpush1.msra.mxu0 %v690
      %1590 = vmatprep.subr.mxu0 %v685
      %1591 = vmatpush1.msra.mxu0 %v684
      %1592 = vmatprep.subr.mxu0 %v679
      %1593 = vmatpush1.msra.mxu0 %v678
      %1594 = vmatprep.subr.mxu0 %v673
      %1595 = vmatpush1.msra.mxu0 %v672
      %1596 = vmatprep.subr.mxu0 %v667
      %1597 = vmatpush1.msra.mxu0 %v666
      %1598 = vmatprep.subr.mxu0 %v661
      %1599 = vmatpush1.msra.mxu0 %v660
      %1600 = vmatprep.subr.mxu0 %v847
      %1601 = vmatpush2.msra.mxu0 %v846
      %1602 = vmatprep.subr.mxu0 %v841
      %1603 = vmatpush2.msra.mxu0 %v840
      %1604 = vmatprep.subr.mxu0 %v835
      %1605 = vmatpush2.msra.mxu0 %v834
      %1606 = vmatprep.subr.mxu0 %v829
      %1607 = vmatpush2.msra.mxu0 %v828
      %1608 = vmatprep.subr.mxu0 %v823
      %1609 = vmatpush2.msra.mxu0 %v822
      %1610 = vmatprep.subr.mxu0 %v817
      %1611 = vmatpush2.msra.mxu0 %v816
      %1612 = vmatprep.subr.mxu0 %v811
      %1613 = vmatpush2.msra.mxu0 %v810
      %1614 = vmatprep.subr.mxu0 %v805
      %1615 = vmatpush2.msra.mxu0 %v804
      %1616 = vmatprep.subr.mxu0 %v799
      %1617 = vmatpush2.msra.mxu0 %v798
      %1618 = vmatprep.subr.mxu0 %v793
      %1619 = vmatpush2.msra.mxu0 %v792
      %1620 = vmatprep.subr.mxu0 %v787
      %1621 = vmatpush2.msra.mxu0 %v786
      %1622 = vmatprep.subr.mxu0 %v781
      %1623 = vmatpush2.msra.mxu0 %v780
      %1624 = vmatprep.subr.mxu0 %v775
      %1625 = vmatpush2.msra.mxu0 %v774
      %1626 = vmatprep.subr.mxu0 %v769
      %1627 = vmatpush2.msra.mxu0 %v768
      %1628 = vmatprep.subr.mxu0 %v763
      %1629 = vmatpush2.msra.mxu0 %v762
      %1630 = vmatprep.subr.mxu0 %v757
      %1631 = vmatpush2.msra.mxu0 %v756
      %1632 = vmatprep.mubr.f32.mxu0 %v1412
      %1633 = vmatmul.mubr.f32.gmra.mxu0 %v1411
      %v1634 = vpop.f32.mrf.mxu0
      %v1635 = vadd.f32 %v869, %v1634
      %v1636 = vpop.f32.mrf.mxu0
      %v1637 = vadd.f32 %v873, %v1636
      %1638 = vdwg.mxu0
      %v1639 = vadd.f32 %v1420, %v1493
      %v1640 = vadd.f32 %v1421, %v1495
      %v1641 = vxor.u32 %v1639, 2147483648
      %v1642 = vxor.u32 %v1640, 2147483648
      %v1643 = vmul.f32 %v1641, 1.442695
      %v1644 = vpow.pop %v1643
      %v1645 = vmul.f32 %v1642, 1.442695
      %v1646 = vpow.pop %v1645
      %v1647 = vadd.f32 %v1644, 1.0
      %v1648 = vadd.f32 %v1646, 1.0
      %v1649 = vrcp.pop %v1647
      %v1650 = vmul.f32 1.0, %v1649
      %v1651 = vrcp.pop %v1648
      %v1652 = vmul.f32 1.0, %v1651
      %v1653 = vadd.f32 %v1422, %v1564
      %v1654 = vadd.f32 %v1423, %v1566
      %v1655 = vxor.u32 %v1653, 2147483648
      %v1656 = vxor.u32 %v1654, 2147483648
      %v1657 = vmul.f32 %v1655, 1.442695
      %v1658 = vpow.pop %v1657
      %v1659 = vmul.f32 %v1656, 1.442695
      %v1660 = vpow.pop %v1659
      %v1661 = vadd.f32 %v1658, 1.0
      %v1662 = vadd.f32 %v1660, 1.0
      %v1663 = vrcp.pop %v1661
      %v1664 = vmul.f32 1.0, %v1663
      %v1665 = vrcp.pop %v1662
      %v1666 = vmul.f32 1.0, %v1665
      %v1667 = vmul.f32 %v1650, %v1635
      %v1668 = vmul.f32 %v1652, %v1637
      %v1669 = vadd.f32 %v1424, %v1667
      %v1670 = vadd.f32 %v1425, %v1668
      %v1671 = vtanh.pop %v1669
      %v1672 = vtanh.pop %v1670
      %v1673 = vsub.f32 1.0, %v1664
      %v1674 = vsub.f32 1.0, %v1666
      %v1675 = vmul.f32 %v1673, %v1671
      %v1676 = vmul.f32 %v1674, %v1672
      %v1677 = vmul.f32 %v1664, %v1411
      %v1678 = vmul.f32 %v1666, %v1412
      %v1679 = vadd.f32 %v1675, %v1677
      %v1680 = vadd.f32 %v1676, %v1678
      %s1681 = scalar_lea.vmem %s288, 16
      %1682 = vst [vmem:[%s1681] sm:$0xff] %v1679
      %s1683 = scalar_lea.vmem %s295, 8
      %1684 = vst [vmem:[%s1683] sm:$0xff] %v1680
      %s1685 = smul.u32 3, 6
      %s1686 = smul.addr %s1685, 8
      %s1687 = scalar_lea.vmem [#allocation2], %s1686
      %v1688 = vld [vmem:[%s1687] sm:$0xff]
      %v1689 = vld [vmem:[%s1687 + $0x8] sm:$0xff]
      %v1690 = vld [vmem:[%s1687 + $0x10] sm:$0xff]
      %v1691 = vld [vmem:[%s1687 + $0x18] sm:$0xff]
      %v1692 = vld [vmem:[%s1687 + $0x20] sm:$0xff]
      %v1693 = vld [vmem:[%s1687 + $0x28] sm:$0xff]
      %1694 = vmatprep.subr.mxu0 %v747
      %1695 = vmatpush1.msra.mxu0 %v746
      %1696 = vmatprep.subr.mxu0 %v741
      %1697 = vmatpush1.msra.mxu0 %v740
      %1698 = vmatprep.subr.mxu0 %v735
      %1699 = vmatpush1.msra.mxu0 %v734
      %1700 = vmatprep.subr.mxu0 %v729
      %1701 = vmatpush1.msra.mxu0 %v728
      %1702 = vmatprep.subr.mxu0 %v723
      %1703 = vmatpush1.msra.mxu0 %v722
      %1704 = vmatprep.subr.mxu0 %v717
      %1705 = vmatpush1.msra.mxu0 %v716
      %1706 = vmatprep.subr.mxu0 %v711
      %1707 = vmatpush1.msra.mxu0 %v710
      %1708 = vmatprep.subr.mxu0 %v705
      %1709 = vmatpush1.msra.mxu0 %v704
      %1710 = vmatprep.subr.mxu0 %v699
      %1711 = vmatpush1.msra.mxu0 %v698
      %1712 = vmatprep.subr.mxu0 %v693
      %1713 = vmatpush1.msra.mxu0 %v692
      %1714 = vmatprep.subr.mxu0 %v687
      %1715 = vmatpush1.msra.mxu0 %v686
      %1716 = vmatprep.subr.mxu0 %v681
      %1717 = vmatpush1.msra.mxu0 %v680
      %1718 = vmatprep.subr.mxu0 %v675
      %1719 = vmatpush1.msra.mxu0 %v674
      %1720 = vmatprep.subr.mxu0 %v669
      %1721 = vmatpush1.msra.mxu0 %v668
      %1722 = vmatprep.subr.mxu0 %v663
      %1723 = vmatpush1.msra.mxu0 %v662
      %1724 = vmatprep.subr.mxu0 %v657
      %1725 = vmatpush1.msra.mxu0 %v656
      %1726 = vmatprep.subr.mxu0 %v843
      %1727 = vmatpush2.msra.mxu0 %v842
      %1728 = vmatprep.subr.mxu0 %v837
      %1729 = vmatpush2.msra.mxu0 %v836
      %1730 = vmatprep.subr.mxu0 %v831
      %1731 = vmatpush2.msra.mxu0 %v830
      %1732 = vmatprep.subr.mxu0 %v825
      %1733 = vmatpush2.msra.mxu0 %v824
      %1734 = vmatprep.subr.mxu0 %v819
      %1735 = vmatpush2.msra.mxu0 %v818
      %1736 = vmatprep.subr.mxu0 %v813
      %1737 = vmatpush2.msra.mxu0 %v812
      %1738 = vmatprep.subr.mxu0 %v807
      %1739 = vmatpush2.msra.mxu0 %v806
      %1740 = vmatprep.subr.mxu0 %v801
      %1741 = vmatpush2.msra.mxu0 %v800
      %1742 = vmatprep.subr.mxu0 %v795
      %1743 = vmatpush2.msra.mxu0 %v794
      %1744 = vmatprep.subr.mxu0 %v789
      %1745 = vmatpush2.msra.mxu0 %v788
      %1746 = vmatprep.subr.mxu0 %v783
      %1747 = vmatpush2.msra.mxu0 %v782
      %1748 = vmatprep.subr.mxu0 %v777
      %1749 = vmatpush2.msra.mxu0 %v776
      %1750 = vmatprep.subr.mxu0 %v771
      %1751 = vmatpush2.msra.mxu0 %v770
      %1752 = vmatprep.subr.mxu0 %v765
      %1753 = vmatpush2.msra.mxu0 %v764
      %1754 = vmatprep.subr.mxu0 %v759
      %1755 = vmatpush2.msra.mxu0 %v758
      %1756 = vmatprep.subr.mxu0 %v753
      %1757 = vmatpush2.msra.mxu0 %v752
      %1758 = vmatprep.mubr.f32.mxu0 %v1680
      %1759 = vmatmul.mubr.f32.gmra.mxu0 %v1679
      %v1760 = vpop.f32.mrf.mxu0
      %v1761 = vadd.f32 %v853, %v1760
      %v1762 = vpop.f32.mrf.mxu0
      %v1763 = vadd.f32 %v857, %v1762
      %1764 = vdwg.mxu0
      %1765 = vmatprep.subr.mxu0 %v749
      %1766 = vmatpush1.msra.mxu0 %v748
      %1767 = vmatprep.subr.mxu0 %v743
      %1768 = vmatpush1.msra.mxu0 %v742
      %1769 = vmatprep.subr.mxu0 %v737
      %1770 = vmatpush1.msra.mxu0 %v736
      %1771 = vmatprep.subr.mxu0 %v731
      %1772 = vmatpush1.msra.mxu0 %v730
      %1773 = vmatprep.subr.mxu0 %v725
      %1774 = vmatpush1.msra.mxu0 %v724
      %1775 = vmatprep.subr.mxu0 %v719
      %1776 = vmatpush1.msra.mxu0 %v718
      %1777 = vmatprep.subr.mxu0 %v713
      %1778 = vmatpush1.msra.mxu0 %v712
      %1779 = vmatprep.subr.mxu0 %v707
      %1780 = vmatpush1.msra.mxu0 %v706
      %1781 = vmatprep.subr.mxu0 %v701
      %1782 = vmatpush1.msra.mxu0 %v700
      %1783 = vmatprep.subr.mxu0 %v695
      %1784 = vmatpush1.msra.mxu0 %v694
      %1785 = vmatprep.subr.mxu0 %v689
      %1786 = vmatpush1.msra.mxu0 %v688
      %1787 = vmatprep.subr.mxu0 %v683
      %1788 = vmatpush1.msra.mxu0 %v682
      %1789 = vmatprep.subr.mxu0 %v677
      %1790 = vmatpush1.msra.mxu0 %v676
      %1791 = vmatprep.subr.mxu0 %v671
      %1792 = vmatpush1.msra.mxu0 %v670
      %1793 = vmatprep.subr.mxu0 %v665
      %1794 = vmatpush1.msra.mxu0 %v664
      %1795 = vmatprep.subr.mxu0 %v659
      %1796 = vmatpush1.msra.mxu0 %v658
      %1797 = vmatprep.subr.mxu0 %v845
      %1798 = vmatpush2.msra.mxu0 %v844
      %1799 = vmatprep.subr.mxu0 %v839
      %1800 = vmatpush2.msra.mxu0 %v838
      %1801 = vmatprep.subr.mxu0 %v833
      %1802 = vmatpush2.msra.mxu0 %v832
      %1803 = vmatprep.subr.mxu0 %v827
      %1804 = vmatpush2.msra.mxu0 %v826
      %1805 = vmatprep.subr.mxu0 %v821
      %1806 = vmatpush2.msra.mxu0 %v820
      %1807 = vmatprep.subr.mxu0 %v815
      %1808 = vmatpush2.msra.mxu0 %v814
      %1809 = vmatprep.subr.mxu0 %v809
      %1810 = vmatpush2.msra.mxu0 %v808
      %1811 = vmatprep.subr.mxu0 %v803
      %1812 = vmatpush2.msra.mxu0 %v802
      %1813 = vmatprep.subr.mxu0 %v797
      %1814 = vmatpush2.msra.mxu0 %v796
      %1815 = vmatprep.subr.mxu0 %v791
      %1816 = vmatpush2.msra.mxu0 %v790
      %1817 = vmatprep.subr.mxu0 %v785
      %1818 = vmatpush2.msra.mxu0 %v784
      %1819 = vmatprep.subr.mxu0 %v779
      %1820 = vmatpush2.msra.mxu0 %v778
      %1821 = vmatprep.subr.mxu0 %v773
      %1822 = vmatpush2.msra.mxu0 %v772
      %1823 = vmatprep.subr.mxu0 %v767
      %1824 = vmatpush2.msra.mxu0 %v766
      %1825 = vmatprep.subr.mxu0 %v761
      %1826 = vmatpush2.msra.mxu0 %v760
      %1827 = vmatprep.subr.mxu0 %v755
      %1828 = vmatpush2.msra.mxu0 %v754
      %1829 = vmatprep.mubr.f32.mxu0 %v1680
      %1830 = vmatmul.mubr.f32.gmra.mxu0 %v1679
      %v1831 = vpop.f32.mrf.mxu0
      %v1832 = vadd.f32 %v861, %v1831
      %v1833 = vpop.f32.mrf.mxu0
      %v1834 = vadd.f32 %v865, %v1833
      %1835 = vdwg.mxu0
      %1836 = vmatprep.subr.mxu0 %v751
      %1837 = vmatpush1.msra.mxu0 %v750
      %1838 = vmatprep.subr.mxu0 %v745
      %1839 = vmatpush1.msra.mxu0 %v744
      %1840 = vmatprep.subr.mxu0 %v739
      %1841 = vmatpush1.msra.mxu0 %v738
      %1842 = vmatprep.subr.mxu0 %v733
      %1843 = vmatpush1.msra.mxu0 %v732
      %1844 = vmatprep.subr.mxu0 %v727
      %1845 = vmatpush1.msra.mxu0 %v726
      %1846 = vmatprep.subr.mxu0 %v721
      %1847 = vmatpush1.msra.mxu0 %v720
      %1848 = vmatprep.subr.mxu0 %v715
      %1849 = vmatpush1.msra.mxu0 %v714
      %1850 = vmatprep.subr.mxu0 %v709
      %1851 = vmatpush1.msra.mxu0 %v708
      %1852 = vmatprep.subr.mxu0 %v703
      %1853 = vmatpush1.msra.mxu0 %v702
      %1854 = vmatprep.subr.mxu0 %v697
      %1855 = vmatpush1.msra.mxu0 %v696
      %1856 = vmatprep.subr.mxu0 %v691
      %1857 = vmatpush1.msra.mxu0 %v690
      %1858 = vmatprep.subr.mxu0 %v685
      %1859 = vmatpush1.msra.mxu0 %v684
      %1860 = vmatprep.subr.mxu0 %v679
      %1861 = vmatpush1.msra.mxu0 %v678
      %1862 = vmatprep.subr.mxu0 %v673
      %1863 = vmatpush1.msra.mxu0 %v672
      %1864 = vmatprep.subr.mxu0 %v667
      %1865 = vmatpush1.msra.mxu0 %v666
      %1866 = vmatprep.subr.mxu0 %v661
      %1867 = vmatpush1.msra.mxu0 %v660
      %1868 = vmatprep.subr.mxu0 %v847
      %1869 = vmatpush2.msra.mxu0 %v846
      %1870 = vmatprep.subr.mxu0 %v841
      %1871 = vmatpush2.msra.mxu0 %v840
      %1872 = vmatprep.subr.mxu0 %v835
      %1873 = vmatpush2.msra.mxu0 %v834
      %1874 = vmatprep.subr.mxu0 %v829
      %1875 = vmatpush2.msra.mxu0 %v828
      %1876 = vmatprep.subr.mxu0 %v823
      %1877 = vmatpush2.msra.mxu0 %v822
      %1878 = vmatprep.subr.mxu0 %v817
      %1879 = vmatpush2.msra.mxu0 %v816
      %1880 = vmatprep.subr.mxu0 %v811
      %1881 = vmatpush2.msra.mxu0 %v810
      %1882 = vmatprep.subr.mxu0 %v805
      %1883 = vmatpush2.msra.mxu0 %v804
      %1884 = vmatprep.subr.mxu0 %v799
      %1885 = vmatpush2.msra.mxu0 %v798
      %1886 = vmatprep.subr.mxu0 %v793
      %1887 = vmatpush2.msra.mxu0 %v792
      %1888 = vmatprep.subr.mxu0 %v787
      %1889 = vmatpush2.msra.mxu0 %v786
      %1890 = vmatprep.subr.mxu0 %v781
      %1891 = vmatpush2.msra.mxu0 %v780
      %1892 = vmatprep.subr.mxu0 %v775
      %1893 = vmatpush2.msra.mxu0 %v774
      %1894 = vmatprep.subr.mxu0 %v769
      %1895 = vmatpush2.msra.mxu0 %v768
      %1896 = vmatprep.subr.mxu0 %v763
      %1897 = vmatpush2.msra.mxu0 %v762
      %1898 = vmatprep.subr.mxu0 %v757
      %1899 = vmatpush2.msra.mxu0 %v756
      %1900 = vmatprep.mubr.f32.mxu0 %v1680
      %1901 = vmatmul.mubr.f32.gmra.mxu0 %v1679
      %v1902 = vpop.f32.mrf.mxu0
      %v1903 = vadd.f32 %v869, %v1902
      %v1904 = vpop.f32.mrf.mxu0
      %v1905 = vadd.f32 %v873, %v1904
      %1906 = vdwg.mxu0
      %v1907 = vadd.f32 %v1688, %v1761
      %v1908 = vadd.f32 %v1689, %v1763
      %v1909 = vxor.u32 %v1907, 2147483648
      %v1910 = vxor.u32 %v1908, 2147483648
      %v1911 = vmul.f32 %v1909, 1.442695
      %v1912 = vpow.pop %v1911
      %v1913 = vmul.f32 %v1910, 1.442695
      %v1914 = vpow.pop %v1913
      %v1915 = vadd.f32 %v1912, 1.0
      %v1916 = vadd.f32 %v1914, 1.0
      %v1917 = vrcp.pop %v1915
      %v1918 = vmul.f32 1.0, %v1917
      %v1919 = vrcp.pop %v1916
      %v1920 = vmul.f32 1.0, %v1919
      %v1921 = vadd.f32 %v1690, %v1832
      %v1922 = vadd.f32 %v1691, %v1834
      %v1923 = vxor.u32 %v1921, 2147483648
      %v1924 = vxor.u32 %v1922, 2147483648
      %v1925 = vmul.f32 %v1923, 1.442695
      %v1926 = vpow.pop %v1925
      %v1927 = vmul.f32 %v1924, 1.442695
      %v1928 = vpow.pop %v1927
      %v1929 = vadd.f32 %v1926, 1.0
      %v1930 = vadd.f32 %v1928, 1.0
      %v1931 = vrcp.pop %v1929
      %v1932 = vmul.f32 1.0, %v1931
      %v1933 = vrcp.pop %v1930
      %v1934 = vmul.f32 1.0, %v1933
      %v1935 = vmul.f32 %v1918, %v1903
      %v1936 = vmul.f32 %v1920, %v1905
      %v1937 = vadd.f32 %v1692, %v1935
      %v1938 = vadd.f32 %v1693, %v1936
      %v1939 = vtanh.pop %v1937
      %v1940 = vtanh.pop %v1938
      %v1941 = vsub.f32 1.0, %v1932
      %v1942 = vsub.f32 1.0, %v1934
      %v1943 = vmul.f32 %v1941, %v1939
      %v1944 = vmul.f32 %v1942, %v1940
      %v1945 = vmul.f32 %v1932, %v1679
      %v1946 = vmul.f32 %v1934, %v1680
      %v1947 = vadd.f32 %v1943, %v1945
      %v1948 = vadd.f32 %v1944, %v1946
      %s1949 = scalar_lea.vmem %s288, 24
      %1950 = vst [vmem:[%s1949] sm:$0xff] %v1947
      %1951 = vst [vmem:[%s295] sm:$0xff] %v1948
      %1952 = vst [vmem:[#allocation3] sm:$0xff] %v1947
      %1953 = vst [vmem:[#allocation3 + $0x8] sm:$0xff] %v1948
      %p1954 = scmp.eq.s32.totalorder %s19, 1
      // Predicated region
      $region45: #{encoder_forward.1} parent=39 // pred_check
        %p1955 = pneg %p1954
      $region46: #{encoder_forward.1} parent=39 // pred_check_branch
        %1957 = sbr.rel (%p1955) target = $region48
      $region47: #{encoder_forward.1} parent=39 // pred_region
        %v1958 = vld [vmem:[#allocation3] sm:$0xff]
        %v1959 = vld [vmem:[#allocation3 + $0x8] sm:$0xff]
        %1960 = vst [vmem:[%s7] sm:$0xff] %v1958
        %1961 = vst [vmem:[%s7 + $0x8] sm:$0xff] %v1959
      $region48: #{encoder_forward.1} parent=39 // pred_fallthru
        _
      %s1962 = smul.u32 4, %s19
      %p1963 = scmp.lt.s32.totalorder %s1962, 7
      %s1964 = scalar_select %p1963, %s1962, 7
      %s1965 = smul.addr %s1964, 8
      %s1966 = scalar_lea.vmem %s5, %s1965
      %s1967 = ssub.s32 1, %s19
      %s1968 = smul.u32 4, %s1967
      %p1969 = scmp.lt.s32.totalorder %s1968, 7
      %s1970 = scalar_select %p1969, %s1968, 7
      %s1971 = smul.addr %s1970, 8
      %s1972 = scalar_lea.vmem %s6, %s1971
      // Predicated region
      $region49: #{encoder_forward.1} parent=39 // pred_check
        %p1973 = pneg %p147
      $region50: #{encoder_forward.1} parent=39 // pred_check_branch
        %1975 = sbr.rel (%p1973) target = $region52
      $region51: #{encoder_forward.1} parent=39 // pred_region
        %s1976 = smul.u32 4, %s19
      $region52: #{encoder_forward.1} parent=39 // pred_fallthru
        _
      // Predicated region
      $region53: #{encoder_forward.1} parent=39 // pred_check
        %p1977 = pneg %p175
      $region54: #{encoder_forward.1} parent=39 // pred_check_branch
        %1979 = sbr.rel (%p1977) target = $region56
      $region55: #{encoder_forward.1} parent=39 // pred_region
        %s1980 = ssub.s32 1, %s19
        %s1981 = smul.u32 4, %s1980
      $region56: #{encoder_forward.1} parent=39 // pred_fallthru
        _
      // Predicated region
      $region57: #{encoder_forward.1} parent=39 // pred_check
        %p1982 = pneg %p196
      $region58: #{encoder_forward.1} parent=39 // pred_check_branch
        %1984 = sbr.rel (%p1982) target = $region60
      $region59: #{encoder_forward.1} parent=39 // pred_region
        _
      $region60: #{encoder_forward.1} parent=39 // pred_fallthru
        _
      // Predicated region
      $region61: #{encoder_forward.1} parent=39 // pred_check
        %p1985 = pneg %p196
      $region62: #{encoder_forward.1} parent=39 // pred_check_branch
        %1987 = sbr.rel (%p1985) target = $region64
      $region63: #{encoder_forward.1} parent=39 // pred_region
        _
      $region64: #{encoder_forward.1} parent=39 // pred_fallthru
        _
    $region40: #{encoder_forward.1} parent=5 // pred_fallthru
      _
    %p1988 = scmp.le.s32.totalorder 2, %s14
    // Predicated region
    $region65: #{encoder_forward.1} parent=5 // pred_check
      %p1989 = pneg %p1988
    $region66: #{encoder_forward.1} parent=5 // pred_check_branch
      %1991 = sbr.rel (%p1989) target = $region68
    $region67: #{encoder_forward.1} parent=5 // pred_region
      %s1992 = ssub.s32 %s14, 2
      // Predicated region
      $region69: #{encoder_forward.1} parent=67 // pred_check
        %p1993 = pneg %p153
      $region70: #{encoder_forward.1} parent=67 // pred_check_branch
        %1995 = sbr.rel (%p1993) target = $region72
      $region71: #{encoder_forward.1} parent=67 // pred_region
        %s1996 = smul.u32 4, %s20
        %p1997 = scmp.lt.s32.totalorder %s1996, 7
        %s1998 = scalar_select %p1997, %s1996, 7
        %s1999 = smul.addr %s1998, 8
        %s2000 = scalar_lea.vmem %s5, %s1999
      $region72: #{encoder_forward.1} parent=67 // pred_fallthru
        _
      // Predicated region
      $region73: #{encoder_forward.1} parent=67 // pred_check
        %p2001 = pneg %p181
      $region74: #{encoder_forward.1} parent=67 // pred_check_branch
        %2003 = sbr.rel (%p2001) target = $region76
      $region75: #{encoder_forward.1} parent=67 // pred_region
        %s2004 = ssub.s32 1, %s20
        %s2005 = smul.u32 4, %s2004
        %p2006 = scmp.lt.s32.totalorder %s2005, 7
        %s2007 = scalar_select %p2006, %s2005, 7
        %s2008 = smul.addr %s2007, 8
        %s2009 = scalar_lea.vmem %s6, %s2008
      $region76: #{encoder_forward.1} parent=67 // pred_fallthru
        _
    $region68: #{encoder_forward.1} parent=5 // pred_fallthru
      _
  $region6: #{encoder_forward.1} parent=0 // loop_footer
    %s18 = sadd.s32 1, %s14
  $region7: #{encoder_forward.1} parent=0 // loop_footer_branch
    %13 = sbr.rel target = $region3
  $region8: #{encoder_forward.1} parent=0 // loop_exit
    _

</llo_original>
